<compile_context>
chip_gen: v5e
topology: v5e:2x2
jax: 0.10.0
libtpu: 0.0.40
codegen_flags: <defaults>
</compile_context>

<pallas_src>
from functools import partial

import jax
import jax.numpy as jnp
from jax import lax
from jax.experimental import pallas as pl
from jax.experimental.pallas import tpu as pltpu

# ----------------------------- config (opt) ----------------------------------
VOCAB = 30522          # nn.Linear(opt.bert_dim, 30522)
BERT_DIM = 32          # opt.bert_dim (small synthetic)
SEQ = 8
BATCH = 2
DROPOUT_P = 0.1        # opt.dropout
TN = 3840              # vocab (lane) tile: 8 grid steps, multiple of 128
VOCAB_PAD = ((VOCAB + TN - 1) // TN) * TN   # 30720
assert VOCAB_PAD % 128 == 0 and VOCAB_PAD % TN == 0


# ------------------------- fused Pallas MLM-head kernel ------------------------
def _mlm_head_kernel(x_ref, bits_ref, w_ref, b_ref, lbl_ref,
                     word_ref, loss_ref,
                     xd_scr, m_scr, l_scr, pick_scr,
                     *, rate, vocab, tn):
    j = pl.program_id(0)
    nj = pl.num_programs(0)

    @pl.when(j == 0)
    def _init():
        # Inverted dropout applied once to the resident (M, D) hidden states.
        # bits are uniform int32 in [0, 2^31); keep iff bits >= rate * 2^31
        # (pure integer compare, no float conversion passes).
        thr = jnp.int32(int(rate * (1 << 31)))
        keep = bits_ref[...] >= thr
        scale = jnp.float32(1.0 / (1.0 - rate))
        xd_scr[...] = jnp.where(keep, x_ref[...] * scale,
                                jnp.zeros_like(x_ref[...])).astype(xd_scr.dtype)
        m_scr[...] = jnp.full_like(m_scr, -1e30)
        l_scr[...] = jnp.zeros_like(l_scr)
        pick_scr[...] = jnp.zeros_like(pick_scr)

    # word_dense tile: (M, D) @ (D, TN) on the MXU, bf16 inputs, f32 accumulation.
    z = jnp.dot(xd_scr[...], w_ref[...],
                preferred_element_type=jnp.float32) + b_ref[...]
    word_ref[...] = z                                        # stream logits to HBM once

    M = z.shape[0]
    col = j * tn + lax.broadcasted_iota(jnp.int32, (M, tn), 1)
    zm = jnp.where(col < vocab, z, -1e30)                    # mask vocab padding

    # online log-sum-exp accumulation
    m_old = m_scr[...]
    m_new = jnp.maximum(m_old, jnp.max(zm, axis=-1, keepdims=True))
    l_scr[...] = jnp.exp(m_old - m_new) * l_scr[...] + \
                 jnp.sum(jnp.exp(zm - m_new), axis=-1, keepdims=True)
    m_scr[...] = m_new

    # picked logit z[i, label_i]; each label hits exactly one vocab tile
    lbl = lbl_ref[...]                                       # (M, 1) int32
    pick_scr[...] += jnp.sum(jnp.where(col == lbl, z, jnp.zeros_like(z)),
                             axis=-1, keepdims=True)

    @pl.when(j == nj - 1)
    def _finalize():
        lse = m_scr[...] + jnp.log(l_scr[...])               # (M, 1)
        nll = lse - pick_scr[...]                            # -log_softmax[label]
        valid = (lbl_ref[...] != 0).astype(jnp.float32)      # ignore_index=0
        total = jnp.sum(nll * valid, axis=0, keepdims=True)  # (1, 1)
        count = jnp.sum(valid, axis=0, keepdims=True)        # (1, 1)
        loss_ref[...] = total / jnp.maximum(count, 1.0)      # guard count == 0


def mlm_head_pallas(h, bits, w_pad, b_pad, labels2):
    M, D = h.shape
    Np = w_pad.shape[1]
    word_pad, loss = pl.pallas_call(
        partial(_mlm_head_kernel, rate=DROPOUT_P, vocab=VOCAB, tn=TN),
        out_shape=(jax.ShapeDtypeStruct((M, Np), jnp.float32),
                   jax.ShapeDtypeStruct((1, 1), jnp.float32)),
        grid=(Np // TN,),
        in_specs=[pl.BlockSpec((M, D), lambda j: (0, 0)),    # hidden states (resident)
                  pl.BlockSpec((M, D), lambda j: (0, 0)),    # dropout bits (resident)
                  pl.BlockSpec((D, TN), lambda j: (0, j)),   # bf16 weight tile
                  pl.BlockSpec((1, TN), lambda j: (0, j)),   # bias tile
                  pl.BlockSpec((M, 1), lambda j: (0, 0))],   # labels (resident)
        out_specs=[pl.BlockSpec((M, TN), lambda j: (0, j)),  # lane-dense logits
                   pl.BlockSpec((1, 1), lambda j: (0, 0))],  # loss (resident accumulator)
        scratch_shapes=[pltpu.VMEM((M, D), jnp.bfloat16),    # dropped hidden states
                        pltpu.VMEM((M, 1), jnp.float32),     # running max
                        pltpu.VMEM((M, 1), jnp.float32),     # running sum-exp
                        pltpu.VMEM((M, 1), jnp.float32)],    # picked logits
        compiler_params=pltpu.CompilerParams(
            dimension_semantics=("arbitrary",)),             # CE accumulates across tiles
    )(h, bits, w_pad, b_pad, labels2)
    return word_pad, loss[0, 0]


# --------------------------- tiny BERT (plain JAX glue) -----------------------
def _layernorm(x, g, b, eps=1e-12):
    mu = jnp.mean(x, axis=-1, keepdims=True)
    var = jnp.mean((x - mu) ** 2, axis=-1, keepdims=True)
    return (x - mu) / jnp.sqrt(var + eps) * g + b


def init_params(key):
    ks = jax.random.split(key, 16)
    s = 0.02
    D, F = BERT_DIM, 4 * BERT_DIM
    Ww = jax.random.normal(ks[9], (D, VOCAB), jnp.float32) * s
    bw = jnp.zeros((VOCAB,), jnp.float32)
    p = {
        "emb": jax.random.normal(ks[0], (VOCAB, D), jnp.float32) * s,
        "pos": jax.random.normal(ks[1], (SEQ, D), jnp.float32) * s,
        "ln_e_g": jnp.ones((D,), jnp.float32), "ln_e_b": jnp.zeros((D,), jnp.float32),
        "Wq": jax.random.normal(ks[2], (D, D), jnp.float32) * s, "bq": jnp.zeros((D,), jnp.float32),
        "Wk": jax.random.normal(ks[3], (D, D), jnp.float32) * s, "bk": jnp.zeros((D,), jnp.float32),
        "Wv": jax.random.normal(ks[4], (D, D), jnp.float32) * s, "bv": jnp.zeros((D,), jnp.float32),
        "Wo": jax.random.normal(ks[5], (D, D), jnp.float32) * s, "bo": jnp.zeros((D,), jnp.float32),
        "ln1_g": jnp.ones((D,), jnp.float32), "ln1_b": jnp.zeros((D,), jnp.float32),
        "W1": jax.random.normal(ks[6], (D, F), jnp.float32) * s, "b1": jnp.zeros((F,), jnp.float32),
        "W2": jax.random.normal(ks[7], (F, D), jnp.float32) * s, "b2": jnp.zeros((D,), jnp.float32),
        "ln2_g": jnp.ones((D,), jnp.float32), "ln2_b": jnp.zeros((D,), jnp.float32),
        "Wp": jax.random.normal(ks[8], (D, D), jnp.float32) * s, "bp": jnp.zeros((D,), jnp.float32),
        # word_dense: nn.Linear(opt.bert_dim, 30522) -- padded + bf16 ONCE at init
        # (hoisted out of the forward; bf16 halves the dominant weight HBM stream,
        #  MXU accumulates in f32 so logits stay f32).
        "Ww_pad": jnp.zeros((D, VOCAB_PAD), jnp.bfloat16).at[:, :VOCAB].set(
            Ww.astype(jnp.bfloat16)),
        "bw_pad": jnp.zeros((1, VOCAB_PAD), jnp.float32).at[:, :VOCAB].set(bw),
    }
    return p


def tiny_bert(p, ids):
    B, S = ids.shape
    D, H = BERT_DIM, 2
    dh = D // H
    h = p["emb"][ids] + p["pos"][None, :S]                      # (B,S,D)
    h = _layernorm(h, p["ln_e_g"], p["ln_e_b"])

    def split_heads(x):
        return x.reshape(B, S, H, dh).transpose(0, 2, 1, 3)     # (B,H,S,dh)

    q = split_heads(h @ p["Wq"] + p["bq"])
    k = split_heads(h @ p["Wk"] + p["bk"])
    v = split_heads(h @ p["Wv"] + p["bv"])
    scores = jnp.einsum("bhqd,bhkd->bhqk", q, k) / jnp.sqrt(float(dh))
    attn = jax.nn.softmax(scores, axis=-1)
    ctx = jnp.einsum("bhqk,bhkd->bhqd", attn, v)
    ctx = ctx.transpose(0, 2, 1, 3).reshape(B, S, D)
    h = _layernorm(h + ctx @ p["Wo"] + p["bo"], p["ln1_g"], p["ln1_b"])
    ffn = jax.nn.gelu(h @ p["W1"] + p["b1"]) @ p["W2"] + p["b2"]
    h = _layernorm(h + ffn, p["ln2_g"], p["ln2_b"])
    pooled = jnp.tanh(h[:, 0] @ p["Wp"] + p["bp"])              # unused downstream
    return h, pooled


# --------------------------- PretrainBERT.forward ------------------------------
def pretrain_bert_forward(params, text_bert_indices, labels=None, dropout_seed=0):
    B, S = text_bert_indices.shape
    last_hidden_states, _pooled = tiny_bert(params, text_bert_indices)   # (B,S,D)
    h = last_hidden_states.reshape(B * S, BERT_DIM).astype(jnp.float32)
    M = B * S

    # Dropout randomness: uniform int32 in [0, 2^31), thresholded inside the kernel.
    # TODO(synk): on bare TPU the in-kernel pltpu.prng_seed/prng_random_bits path
    # could be used; host-side bits keep the interpret/CPU fallback path working.
    bits = (jax.random.bits(jax.random.PRNGKey(dropout_seed), (M, BERT_DIM),
                            dtype=jnp.uint32) >> 1).astype(jnp.int32)

    if labels is None:
        labels2 = jnp.zeros((M, 1), jnp.int32)      # all ignore_index; loss discarded
    else:
        labels2 = labels.reshape(M, 1).astype(jnp.int32)

    # fused: dropout + word_dense + CrossEntropyLoss(ignore_index=0, mean)
    word_pad, loss = mlm_head_pallas(h, bits, params["Ww_pad"], params["bw_pad"],
                                     labels2)                           # (M, 30720), ()
    word = word_pad[:, :VOCAB]                                          # (B*S, 30522)
    return word, (None if labels is None else loss)


# ------------------------------------ main -------------------------------------
if __name__ == "__main__":
    key = jax.random.PRNGKey(0)
    kp, kid, klbl = jax.random.split(key, 3)
    params = init_params(kp)

    text_bert_indices = jax.random.randint(kid, (BATCH, SEQ), 0, VOCAB, dtype=jnp.int32)
    labels = jax.random.randint(klbl, (BATCH * SEQ,), 0, VOCAB, dtype=jnp.int32)

    word, loss = pretrain_bert_forward(params, text_bert_indices, labels, dropout_seed=0)
    jax.block_until_ready((word, loss))

    assert word.shape == (BATCH * SEQ, VOCAB) and word.dtype == jnp.float32
    assert loss.shape == () and bool(jnp.isfinite(loss))
    print("KERNEL_OK")
</pallas_src>

<mosaic_0001>
module attributes {stable_mosaic.version = 11 : i64} {
  func.func @_mlm_head_kernel(%arg0: i32, %arg1: memref<16x32xf32, #tpu.memory_space<vmem>>, %arg2: memref<16x32xi32, #tpu.memory_space<vmem>>, %arg3: memref<32x3840xbf16, #tpu.memory_space<vmem>>, %arg4: memref<1x3840xf32, #tpu.memory_space<vmem>>, %arg5: memref<16x1xi32, #tpu.memory_space<vmem>>, %arg6: memref<16x3840xf32, #tpu.memory_space<vmem>>, %arg7: memref<1x1xf32, #tpu.memory_space<vmem>>, %arg8: memref<16x32xbf16, #tpu.memory_space<vmem>>, %arg9: memref<16x1xf32, #tpu.memory_space<vmem>>, %arg10: memref<16x1xf32, #tpu.memory_space<vmem>>, %arg11: memref<16x1xf32, #tpu.memory_space<vmem>>) attributes {dimension_semantics = [#tpu.dimension_semantics<arbitrary>], iteration_bounds = array<i64: 8>, scalar_prefetch = 0 : i64, scratch_operands = 4 : i64, tpu.core_type = #tpu.core_type<tc>, window_params = [{pipeline_mode = #tpu.pipeline_mode<synchronous>, transform_indices = @transform_0, window_bounds = array<i64: 16, 32>}, {pipeline_mode = #tpu.pipeline_mode<synchronous>, transform_indices = @transform_1, window_bounds = array<i64: 16, 32>}, {transform_indices = @transform_2, window_bounds = array<i64: 32, 3840>}, {transform_indices = @transform_3, window_bounds = array<i64: 1, 3840>}, {pipeline_mode = #tpu.pipeline_mode<synchronous>, transform_indices = @transform_4, window_bounds = array<i64: 16, 1>}, {transform_indices = @transform_5, window_bounds = array<i64: 16, 3840>}, {pipeline_mode = #tpu.pipeline_mode<synchronous>, transform_indices = @transform_6, window_bounds = array<i64: 1, 1>}]} {
    %c0_i32 = arith.constant 0 : i32
    %0 = arith.cmpi eq, %arg0, %c0_i32 : i32
    %1 = arith.extui %0 : i1 to i32
    %c0_i32_0 = arith.constant 0 : i32
    %2 = arith.cmpi ne, %1, %c0_i32_0 : i32
    scf.if %2 {
      %c0_28 = arith.constant 0 : index
      %c0_29 = arith.constant 0 : index
      %47 = vector.load %arg2[%c0_28, %c0_29] : memref<16x32xi32, #tpu.memory_space<vmem>>, vector<16x32xi32>
      %c214748364_i32 = arith.constant 214748364 : i32
      %48 = vector.broadcast %c214748364_i32 : i32 to vector<16x32xi32>
      %49 = arith.cmpi sge, %47, %48 : vector<16x32xi32>
      %c0_30 = arith.constant 0 : index
      %c0_31 = arith.constant 0 : index
      %50 = vector.load %arg1[%c0_30, %c0_31] : memref<16x32xf32, #tpu.memory_space<vmem>>, vector<16x32xf32>
      %cst_32 = arith.constant 1.11111116 : f32
      %51 = vector.broadcast %cst_32 : f32 to vector<16x32xf32>
      %52 = arith.mulf %50, %51 : vector<16x32xf32>
      %cst_33 = arith.constant 0.000000e+00 : f32
      %53 = vector.broadcast %cst_33 : f32 to vector<16x32xf32>
      %54 = arith.select %49, %52, %53 : vector<16x32xi1>, vector<16x32xf32>
      %55 = arith.truncf %54 : vector<16x32xf32> to vector<16x32xbf16>
      %c0_34 = arith.constant 0 : index
      %c0_35 = arith.constant 0 : index
      %56 = vector.load %arg8[%c0_34, %c0_35] : memref<16x32xbf16, #tpu.memory_space<vmem>>, vector<16x32xbf16>
      tpu.vector_store %arg8[%c0_34, %c0_35], %55 {strides = array<i32>} : memref<16x32xbf16, #tpu.memory_space<vmem>>, vector<16x32xbf16>,
      %cst_36 = arith.constant -1.000000e+30 : f32
      %57 = vector.broadcast %cst_36 : f32 to vector<16x1xf32>
      %c0_37 = arith.constant 0 : index
      %c0_38 = arith.constant 0 : index
      %58 = vector.load %arg9[%c0_37, %c0_38] : memref<16x1xf32, #tpu.memory_space<vmem>>, vector<16x1xf32>
      tpu.vector_store %arg9[%c0_37, %c0_38], %57 {strides = array<i32>} : memref<16x1xf32, #tpu.memory_space<vmem>>, vector<16x1xf32>,
      %cst_39 = arith.constant 0.000000e+00 : f32
      %59 = vector.broadcast %cst_39 : f32 to vector<16x1xf32>
      %c0_40 = arith.constant 0 : index
      %c0_41 = arith.constant 0 : index
      %60 = vector.load %arg10[%c0_40, %c0_41] : memref<16x1xf32, #tpu.memory_space<vmem>>, vector<16x1xf32>
      tpu.vector_store %arg10[%c0_40, %c0_41], %59 {strides = array<i32>} : memref<16x1xf32, #tpu.memory_space<vmem>>, vector<16x1xf32>,
      %cst_42 = arith.constant 0.000000e+00 : f32
      %61 = vector.broadcast %cst_42 : f32 to vector<16x1xf32>
      %c0_43 = arith.constant 0 : index
      %c0_44 = arith.constant 0 : index
      %62 = vector.load %arg11[%c0_43, %c0_44] : memref<16x1xf32, #tpu.memory_space<vmem>>, vector<16x1xf32>
      tpu.vector_store %arg11[%c0_43, %c0_44], %61 {strides = array<i32>} : memref<16x1xf32, #tpu.memory_space<vmem>>, vector<16x1xf32>,
    } else {
    }
    %c0 = arith.constant 0 : index
    %c0_1 = arith.constant 0 : index
    %3 = vector.load %arg8[%c0, %c0_1] : memref<16x32xbf16, #tpu.memory_space<vmem>>, vector<16x32xbf16>
    %c0_2 = arith.constant 0 : index
    %c0_3 = arith.constant 0 : index
    %4 = vector.load %arg3[%c0_2, %c0_3] : memref<32x3840xbf16, #tpu.memory_space<vmem>>, vector<32x3840xbf16>
    %cst = arith.constant dense<0.000000e+00> : vector<16x3840xf32>
    %5 = tpu.matmul %3, %4, %cst {dimension_numbers = #tpu.dot_dimension_numbers<[1], [0], [0], [1], [0, 0, 1, 1], [], []>} : vector<16x32xbf16>, vector<32x3840xbf16>, vector<16x3840xf32> -> vector<16x3840xf32>
    %c0_4 = arith.constant 0 : index
    %c0_5 = arith.constant 0 : index
    %6 = vector.load %arg4[%c0_4, %c0_5] : memref<1x3840xf32, #tpu.memory_space<vmem>>, vector<1x3840xf32>
    %7 = vector.broadcast %6 : vector<1x3840xf32> to vector<16x3840xf32>
    %8 = arith.addf %5, %7 : vector<16x3840xf32>
    %c0_6 = arith.constant 0 : index
    %c0_7 = arith.constant 0 : index
    %9 = vector.load %arg6[%c0_6, %c0_7] : memref<16x3840xf32, #tpu.memory_space<vmem>>, vector<16x3840xf32>
    tpu.vector_store %arg6[%c0_6, %c0_7], %8 {strides = array<i32>} : memref<16x3840xf32, #tpu.memory_space<vmem>>, vector<16x3840xf32>,
    %c3840_i32 = arith.constant 3840 : i32
    %10 = arith.muli %arg0, %c3840_i32 : i32
    %11 = tpu.iota {dimensions = array<i32: 1>} : vector<16x3840xi32>
    %12 = vector.broadcast %10 : i32 to vector<16x3840xi32>
    %13 = arith.addi %12, %11 : vector<16x3840xi32>
    %c30522_i32 = arith.constant 30522 : i32
    %14 = vector.broadcast %c30522_i32 : i32 to vector<16x3840xi32>
    %15 = arith.cmpi slt, %13, %14 : vector<16x3840xi32>
    %cst_8 = arith.constant -1.000000e+30 : f32
    %16 = vector.broadcast %cst_8 : f32 to vector<16x3840xf32>
    %17 = arith.select %15, %8, %16 : vector<16x3840xi1>, vector<16x3840xf32>
    %c0_9 = arith.constant 0 : index
    %c0_10 = arith.constant 0 : index
    %18 = vector.load %arg9[%c0_9, %c0_10] : memref<16x1xf32, #tpu.memory_space<vmem>>, vector<16x1xf32>
    %cst_11 = arith.constant dense<0xFF800000> : vector<16xf32>
    %19 = vector.multi_reduction <maximumf>, %17, %cst_11 [1] : vector<16x3840xf32> to vector<16xf32>
    %20 = vector.shape_cast %19 : vector<16xf32> to vector<16x1xf32>
    %21 = arith.maximumf %18, %20 : vector<16x1xf32>
    %22 = arith.subf %18, %21 : vector<16x1xf32>
    %23 = math.exp %22 : vector<16x1xf32>
    %c0_12 = arith.constant 0 : index
    %c0_13 = arith.constant 0 : index
    %24 = vector.load %arg10[%c0_12, %c0_13] : memref<16x1xf32, #tpu.memory_space<vmem>>, vector<16x1xf32>
    %25 = arith.mulf %23, %24 : vector<16x1xf32>
    %26 = vector.broadcast %21 : vector<16x1xf32> to vector<16x3840xf32>
    %27 = arith.subf %17, %26 : vector<16x3840xf32>
    %28 = math.exp %27 : vector<16x3840xf32>
    %cst_14 = arith.constant dense<0.000000e+00> : vector<16xf32>
    %29 = vector.multi_reduction <add>, %28, %cst_14 [1] : vector<16x3840xf32> to vector<16xf32>
    %30 = vector.shape_cast %29 : vector<16xf32> to vector<16x1xf32>
    %31 = arith.addf %25, %30 : vector<16x1xf32>
    %c0_15 = arith.constant 0 : index
    %c0_16 = arith.constant 0 : index
    %32 = vector.load %arg10[%c0_15, %c0_16] : memref<16x1xf32, #tpu.memory_space<vmem>>, vector<16x1xf32>
    tpu.vector_store %arg10[%c0_15, %c0_16], %31 {strides = array<i32>} : memref<16x1xf32, #tpu.memory_space<vmem>>, vector<16x1xf32>,
    %c0_17 = arith.constant 0 : index
    %c0_18 = arith.constant 0 : index
    %33 = vector.load %arg9[%c0_17, %c0_18] : memref<16x1xf32, #tpu.memory_space<vmem>>, vector<16x1xf32>
    tpu.vector_store %arg9[%c0_17, %c0_18], %21 {strides = array<i32>} : memref<16x1xf32, #tpu.memory_space<vmem>>, vector<16x1xf32>,
    %c0_19 = arith.constant 0 : index
    %c0_20 = arith.constant 0 : index
    %34 = vector.load %arg5[%c0_19, %c0_20] : memref<16x1xi32, #tpu.memory_space<vmem>>, vector<16x1xi32>
    %c0_21 = arith.constant 0 : index
    %c0_22 = arith.constant 0 : index
    %35 = vector.load %arg11[%c0_21, %c0_22] : memref<16x1xf32, #tpu.memory_space<vmem>>, vector<16x1xf32>
    %36 = vector.broadcast %34 : vector<16x1xi32> to vector<16x3840xi32>
    %37 = arith.cmpi eq, %13, %36 : vector<16x3840xi32>
    %cst_23 = arith.constant 0.000000e+00 : f32
    %38 = vector.broadcast %cst_23 : f32 to vector<16x3840xf32>
    %39 = arith.select %37, %8, %38 : vector<16x3840xi1>, vector<16x3840xf32>
    %cst_24 = arith.constant dense<0.000000e+00> : vector<16xf32>
    %40 = vector.multi_reduction <add>, %39, %cst_24 [1] : vector<16x3840xf32> to vector<16xf32>
    %41 = vector.shape_cast %40 : vector<16xf32> to vector<16x1xf32>
    %42 = arith.addf %35, %41 : vector<16x1xf32>
    %c0_25 = arith.constant 0 : index
    %c0_26 = arith.constant 0 : index
    %43 = vector.load %arg11[%c0_25, %c0_26] : memref<16x1xf32, #tpu.memory_space<vmem>>, vector<16x1xf32>
    tpu.vector_store %arg11[%c0_25, %c0_26], %42 {strides = array<i32>} : memref<16x1xf32, #tpu.memory_space<vmem>>, vector<16x1xf32>,
    %c7_i32 = arith.constant 7 : i32
    %44 = arith.cmpi eq, %arg0, %c7_i32 : i32
    %45 = arith.extui %44 : i1 to i32
    %c0_i32_27 = arith.constant 0 : i32
    %46 = arith.cmpi ne, %45, %c0_i32_27 : i32
    scf.if %46 {
      %c0_28 = arith.constant 0 : index
      %c0_29 = arith.constant 0 : index
      %47 = vector.load %arg9[%c0_28, %c0_29] : memref<16x1xf32, #tpu.memory_space<vmem>>, vector<16x1xf32>
      %c0_30 = arith.constant 0 : index
      %c0_31 = arith.constant 0 : index
      %48 = vector.load %arg10[%c0_30, %c0_31] : memref<16x1xf32, #tpu.memory_space<vmem>>, vector<16x1xf32>
      %49 = math.log %48 : vector<16x1xf32>
      %50 = arith.addf %47, %49 : vector<16x1xf32>
      %c0_32 = arith.constant 0 : index
      %c0_33 = arith.constant 0 : index
      %51 = vector.load %arg11[%c0_32, %c0_33] : memref<16x1xf32, #tpu.memory_space<vmem>>, vector<16x1xf32>
      %52 = arith.subf %50, %51 : vector<16x1xf32>
      %c0_34 = arith.constant 0 : index
      %c0_35 = arith.constant 0 : index
      %53 = vector.load %arg5[%c0_34, %c0_35] : memref<16x1xi32, #tpu.memory_space<vmem>>, vector<16x1xi32>
      %c0_i32_36 = arith.constant 0 : i32
      %54 = vector.broadcast %c0_i32_36 : i32 to vector<16x1xi32>
      %55 = arith.cmpi ne, %53, %54 : vector<16x1xi32>
      %56 = arith.extui %55 : vector<16x1xi1> to vector<16x1xi32>
      %57 = arith.sitofp %56 : vector<16x1xi32> to vector<16x1xf32>
      %58 = arith.mulf %52, %57 : vector<16x1xf32>
      %cst_37 = arith.constant dense<0.000000e+00> : vector<1xf32>
      %59 = vector.multi_reduction <add>, %58, %cst_37 [0] : vector<16x1xf32> to vector<1xf32>
      %60 = vector.shape_cast %59 : vector<1xf32> to vector<1x1xf32>
      %cst_38 = arith.constant dense<0.000000e+00> : vector<1xf32>
      %61 = vector.multi_reduction <add>, %57, %cst_38 [0] : vector<16x1xf32> to vector<1xf32>
      %62 = vector.shape_cast %61 : vector<1xf32> to vector<1x1xf32>
      %cst_39 = arith.constant 1.000000e+00 : f32
      %63 = vector.broadcast %cst_39 : f32 to vector<1x1xf32>
      %64 = arith.maximumf %62, %63 : vector<1x1xf32>
      %65 = arith.divf %60, %64 : vector<1x1xf32>
      %c0_40 = arith.constant 0 : index
      %c0_41 = arith.constant 0 : index
      %66 = vector.load %arg7[%c0_40, %c0_41] : memref<1x1xf32, #tpu.memory_space<vmem>>, vector<1x1xf32>
      tpu.vector_store %arg7[%c0_40, %c0_41], %65 {strides = array<i32>} : memref<1x1xf32, #tpu.memory_space<vmem>>, vector<1x1xf32>,
    } else {
    }
    return
  }
  func.func @transform_0(%arg0: i32) -> (i32, i32) {
    %c0_i32 = arith.constant 0 : i32
    %c0_i32_0 = arith.constant 0 : i32
    %c0_i32_1 = arith.constant 0 : i32
    return %c0_i32, %c0_i32_0 : i32, i32
  }
  func.func @transform_1(%arg0: i32) -> (i32, i32) {
    %c0_i32 = arith.constant 0 : i32
    %c0_i32_0 = arith.constant 0 : i32
    %c0_i32_1 = arith.constant 0 : i32
    return %c0_i32, %c0_i32_0 : i32, i32
  }
  func.func @transform_2(%arg0: i32) -> (i32, i32) {
    %c0_i32 = arith.constant 0 : i32
    %c0_i32_0 = arith.constant 0 : i32
    return %c0_i32, %arg0 : i32, i32
  }
  func.func @transform_3(%arg0: i32) -> (i32, i32) {
    %c0_i32 = arith.constant 0 : i32
    %c0_i32_0 = arith.constant 0 : i32
    return %c0_i32, %arg0 : i32, i32
  }
  func.func @transform_4(%arg0: i32) -> (i32, i32) {
    %c0_i32 = arith.constant 0 : i32
    %c0_i32_0 = arith.constant 0 : i32
    %c0_i32_1 = arith.constant 0 : i32
    return %c0_i32, %c0_i32_0 : i32, i32
  }
  func.func @transform_5(%arg0: i32) -> (i32, i32) {
    %c0_i32 = arith.constant 0 : i32
    %c0_i32_0 = arith.constant 0 : i32
    return %c0_i32, %arg0 : i32, i32
  }
  func.func @transform_6(%arg0: i32) -> (i32, i32) {
    %c0_i32 = arith.constant 0 : i32
    %c0_i32_0 = arith.constant 0 : i32
    %c0_i32_1 = arith.constant 0 : i32
    return %c0_i32, %c0_i32_0 : i32, i32
  }
}

</mosaic_0001>

<llo_original>
// kernel: tpu_custom_call.1
$region0: #{tpu_custom_call.1}
  #allocation0 [shape = 'u32[]', space=smem, size = 0x4, offset = 0x4, fixed_abs, tag = 'smem constant byte address 0x4 - core index']
  #allocation1 [shape = 'u32[72,128]{1,0:T(1,128)}', space=vmem, size = 0x9000, scoped, tag = 'internal scratch']
  #allocation2 [shape = 'bf16[16,32]{1,0:T(8,128)(2,1)}', space=vmem, size = 0x1000, scoped, tag = 'scratch operand']
  #allocation3 [shape = 'f32[16,1]{1,0:T(8,128)}', space=vmem, size = 0x2000, scoped, tag = 'scratch operand']
  #allocation4 [shape = 'f32[16,1]{1,0:T(8,128)}', space=vmem, size = 0x2000, scoped, tag = 'scratch operand']
  #allocation5 [shape = 'f32[16,1]{1,0:T(8,128)}', space=vmem, size = 0x2000, scoped, tag = 'scratch operand']
  %s0 = inlined_call_operand.hbm [shape: f32[16,32], index: 0, kind: input, shape index: {}]
  %s1 = inlined_call_operand.hbm [shape: s32[16,32], index: 1, kind: input, shape index: {}]
  %s2 = inlined_call_operand.hbm [shape: bf16[32,30720], index: 2, kind: input, shape index: {}]
  %s3 = inlined_call_operand.hbm [shape: f32[1,30720], index: 3, kind: input, shape index: {}]
  %s4 = inlined_call_operand.vmem [shape: s32[16,1], index: 4, kind: input, shape index: {}]
  %s5 = inlined_call_operand.hbm [shape: f32[16,30720], index: 5, kind: output, shape index: {0}]
  %s6 = inlined_call_operand.hbm [shape: f32[1,1], index: 6, kind: output, shape index: {1}]
  %7 = xla_tuple %s5, %s6
  %s8 = sld [smem:[#allocation0]]
  $region85: #{tpu_custom_call.1} parent=0
    _
  %s10 = ssub.s32 1, %s8
  %s11 = scalar_select 0, %s10, %s8
  $region1: #{tpu_custom_call.1} parent=0
    #allocation6 [shape = 'u8[8192]{0}', space=vmem, size = 0x2000, scoped, tag = 'input window, operand 0, single buffered']
    #allocation7 [shape = 's32[2]{0}', space=sflag, size = 0x8, scoped, tag = 'scoped memory for tpu_custom_call.1']
    #allocation8 [shape = 's32[2]{0}', space=sflag, size = 0x8, scoped, tag = 'scoped memory for tpu_custom_call.1']
    #allocation9 [shape = 'u8[8192]{0}', space=vmem, size = 0x2000, scoped, tag = 'input window, operand 1, single buffered']
    #allocation10 [shape = 's32[1]{0}', space=sflag, size = 0x4, scoped, tag = 'scoped memory for tpu_custom_call.1']
    #allocation11 [shape = 'u8[491520]{0}', space=vmem, size = 0x78000, scoped, tag = 'input window, operand 2']
    #allocation12 [shape = 'u8[30720]{0}', space=vmem, size = 0x7800, scoped, tag = 'input window, operand 3']
    #allocation13 [shape = 'u8[491520]{0}', space=vmem, size = 0x78000, scoped, tag = 'output window, operand 0']
    #allocation14 [shape = 'u8[512]{0}', space=vmem, size = 0x400, scoped, tag = 'output window, operand 1, single buffered']
    #allocation15 [shape = 's32[1]{0}', space=sflag, size = 0x4, scoped, tag = 'scoped memory for tpu_custom_call.1']
    %12 = vsyncpa [#allocation7], 0
    %13 = vsyncpa [#allocation10], 0
    %14 = vsyncpa [#allocation8], 0
    %s15 = scalar_lea.sflag [#allocation8], 1
    %16 = vsyncpa %s15, 0
    %17 = vsyncpa [#allocation15], 0
    loop: start=0, step=1, limit=10
    $region2: #{tpu_custom_call.1} parent=1 // loop_pre_header
      _
    $region3: #{tpu_custom_call.1} parent=1 // loop_header
      %s19 = sphi 0, %s23
      %p20 = scmp.ge.s32.totalorder %s19, 10
      %s27 = sphi 0, %s27
      %s29 = sphi 0, %s27
      %s30 = sphi 0, %s29
      %s44 = sphi 0, %s30
      %s48 = sphi 0, %s48
      %s50 = sphi 0, %s48
      %s51 = sphi 0, %s50
      %s65 = sphi 0, %s51
      %s71 = sphi 0, %s73
      %s74 = sphi 0, %s71
      %s75 = sphi 0, %s74
      %s91 = sphi 0, %s75
      %s97 = sphi 0, %s99
      %s100 = sphi 0, %s97
      %s101 = sphi 0, %s100
      %s117 = sphi 0, %s101
      %s121 = sphi 0, %s121
      %s123 = sphi 0, %s121
      %s124 = sphi 0, %s123
      %s138 = sphi 0, %s124
      %s144 = sphi 0, %s146
      %s147 = sphi 0, %s144
      %s148 = sphi 0, %s147
      %s164 = sphi 0, %s148
      %s168 = sphi 0, %s168
      %s170 = sphi 0, %s168
      %s171 = sphi 0, %s170
      %s185 = sphi 0, %s171
    $region4: #{tpu_custom_call.1} parent=1 // loop_header_branch
      %22 = sbr.rel (%p20) target = $region8
    $region5: #{tpu_custom_call.1} parent=1 // loop_body
      %s24 = ssub.s32 %s19, 1
      %s25 = ssub.s32 %s19, 2
      %s26 = sadd.s32 %s19, 1
      %s28 = sadd.s32 %s27, 1
      %p31 = scmp.eq.s32.totalorder %s19, 7
      %p32 = scmp.ne.s32.totalorder %s27, %s29
      %p33 = scmp.eq.s32.totalorder %s19, 0
      %p34 = por %p32, %p33
      %p35 = scmp.ne.s32.totalorder %s27, %s29
      %p36 = scmp.eq.s32.totalorder %s24, 7
      %p37 = por %p35, %p36
      %p38 = scmp.ne.s32.totalorder %s29, %s30
      %p39 = scmp.eq.s32.totalorder %s24, 0
      %p40 = por %p38, %p39
      %p41 = scmp.ne.s32.totalorder %s29, %s30
      %p42 = scmp.eq.s32.totalorder %s25, 7
      %p43 = por %p41, %p42
      %p45 = scmp.ne.s32.totalorder %s30, %s44
      %p46 = scmp.eq.s32.totalorder %s25, 0
      %p47 = por %p45, %p46
      %s49 = sadd.s32 %s48, 1
      %p52 = scmp.eq.s32.totalorder %s19, 7
      %p53 = scmp.ne.s32.totalorder %s48, %s50
      %p54 = scmp.eq.s32.totalorder %s19, 0
      %p55 = por %p53, %p54
      %p56 = scmp.ne.s32.totalorder %s48, %s50
      %p57 = scmp.eq.s32.totalorder %s24, 7
      %p58 = por %p56, %p57
      %p59 = scmp.ne.s32.totalorder %s50, %s51
      %p60 = scmp.eq.s32.totalorder %s24, 0
      %p61 = por %p59, %p60
      %p62 = scmp.ne.s32.totalorder %s50, %s51
      %p63 = scmp.eq.s32.totalorder %s25, 7
      %p64 = por %p62, %p63
      %p66 = scmp.ne.s32.totalorder %s51, %s65
      %p67 = scmp.eq.s32.totalorder %s25, 0
      %p68 = por %p66, %p67
      %s69 = ssub.s32 %s19, %s26
      %p70 = scmp.eq.s32.totalorder %s69, 0
      %s72 = sadd.s32 %s71, 1
      %s73 = scalar_select %p70, %s71, %s72
      %p76 = pneg %p70
      %p77 = scmp.eq.s32.totalorder %s19, 7
      %p78 = por %p76, %p77
      %p79 = scmp.ne.s32.totalorder %s71, %s74
      %p80 = scmp.eq.s32.totalorder %s19, 0
      %p81 = por %p79, %p80
      %p82 = scmp.ne.s32.totalorder %s71, %s74
      %p83 = scmp.eq.s32.totalorder %s24, 7
      %p84 = por %p82, %p83
      %p85 = scmp.ne.s32.totalorder %s74, %s75
      %p86 = scmp.eq.s32.totalorder %s24, 0
      %p87 = por %p85, %p86
      %p88 = scmp.ne.s32.totalorder %s74, %s75
      %p89 = scmp.eq.s32.totalorder %s25, 7
      %p90 = por %p88, %p89
      %p92 = scmp.ne.s32.totalorder %s75, %s91
      %p93 = scmp.eq.s32.totalorder %s25, 0
      %p94 = por %p92, %p93
      %s95 = ssub.s32 %s19, %s26
      %p96 = scmp.eq.s32.totalorder %s95, 0
      %s98 = sadd.s32 %s97, 1
      %s99 = scalar_select %p96, %s97, %s98
      %p102 = pneg %p96
      %p103 = scmp.eq.s32.totalorder %s19, 7
      %p104 = por %p102, %p103
      %p105 = scmp.ne.s32.totalorder %s97, %s100
      %p106 = scmp.eq.s32.totalorder %s19, 0
      %p107 = por %p105, %p106
      %p108 = scmp.ne.s32.totalorder %s97, %s100
      %p109 = scmp.eq.s32.totalorder %s24, 7
      %p110 = por %p108, %p109
      %p111 = scmp.ne.s32.totalorder %s100, %s101
      %p112 = scmp.eq.s32.totalorder %s24, 0
      %p113 = por %p111, %p112
      %p114 = scmp.ne.s32.totalorder %s100, %s101
      %p115 = scmp.eq.s32.totalorder %s25, 7
      %p116 = por %p114, %p115
      %p118 = scmp.ne.s32.totalorder %s101, %s117
      %p119 = scmp.eq.s32.totalorder %s25, 0
      %p120 = por %p118, %p119
      %s122 = sadd.s32 %s121, 1
      %p125 = scmp.eq.s32.totalorder %s19, 7
      %p126 = scmp.ne.s32.totalorder %s121, %s123
      %p127 = scmp.eq.s32.totalorder %s19, 0
      %p128 = por %p126, %p127
      %p129 = scmp.ne.s32.totalorder %s121, %s123
      %p130 = scmp.eq.s32.totalorder %s24, 7
      %p131 = por %p129, %p130
      %p132 = scmp.ne.s32.totalorder %s123, %s124
      %p133 = scmp.eq.s32.totalorder %s24, 0
      %p134 = por %p132, %p133
      %p135 = scmp.ne.s32.totalorder %s123, %s124
      %p136 = scmp.eq.s32.totalorder %s25, 7
      %p137 = por %p135, %p136
      %p139 = scmp.ne.s32.totalorder %s124, %s138
      %p140 = scmp.eq.s32.totalorder %s25, 0
      %p141 = por %p139, %p140
      %s142 = ssub.s32 %s19, %s26
      %p143 = scmp.eq.s32.totalorder %s142, 0
      %s145 = sadd.s32 %s144, 1
      %s146 = scalar_select %p143, %s144, %s145
      %p149 = pneg %p143
      %p150 = scmp.eq.s32.totalorder %s19, 7
      %p151 = por %p149, %p150
      %p152 = scmp.ne.s32.totalorder %s144, %s147
      %p153 = scmp.eq.s32.totalorder %s19, 0
      %p154 = por %p152, %p153
      %p155 = scmp.ne.s32.totalorder %s144, %s147
      %p156 = scmp.eq.s32.totalorder %s24, 7
      %p157 = por %p155, %p156
      %p158 = scmp.ne.s32.totalorder %s147, %s148
      %p159 = scmp.eq.s32.totalorder %s24, 0
      %p160 = por %p158, %p159
      %p161 = scmp.ne.s32.totalorder %s147, %s148
      %p162 = scmp.eq.s32.totalorder %s25, 7
      %p163 = por %p161, %p162
      %p165 = scmp.ne.s32.totalorder %s148, %s164
      %p166 = scmp.eq.s32.totalorder %s25, 0
      %p167 = por %p165, %p166
      %s169 = sadd.s32 %s168, 1
      %p172 = scmp.eq.s32.totalorder %s19, 7
      %p173 = scmp.ne.s32.totalorder %s168, %s170
      %p174 = scmp.eq.s32.totalorder %s19, 0
      %p175 = por %p173, %p174
      %p176 = scmp.ne.s32.totalorder %s168, %s170
      %p177 = scmp.eq.s32.totalorder %s24, 7
      %p178 = por %p176, %p177
      %p179 = scmp.ne.s32.totalorder %s170, %s171
      %p180 = scmp.eq.s32.totalorder %s24, 0
      %p181 = por %p179, %p180
      %p182 = scmp.ne.s32.totalorder %s170, %s171
      %p183 = scmp.eq.s32.totalorder %s25, 7
      %p184 = por %p182, %p183
      %p186 = scmp.ne.s32.totalorder %s171, %s185
      %p187 = scmp.eq.s32.totalorder %s25, 0
      %p188 = por %p186, %p187
      %p189 = scmp.le.s32.totalorder 1, %s19
      %p190 = scmp.lt.s32.totalorder %s19, 9
      %p191 = pnand %p189, %p190
      %p192 = pneg %p191
      // Predicated region
      $region9: #{tpu_custom_call.1} parent=5 // pred_check
        _
      $region10: #{tpu_custom_call.1} parent=5 // pred_check_branch
        %194 = sbr.rel (%p191) target = $region12
      $region11: #{tpu_custom_call.1} parent=5 // pred_region
        %s195 = ssub.s32 %s19, 1
        // Predicated region
        $region13: #{tpu_custom_call.1} parent=11 // pred_check
          %p196 = pneg %p40
        $region14: #{tpu_custom_call.1} parent=11 // pred_check_branch
          %198 = sbr.rel (%p196) target = $region16
        $region15: #{tpu_custom_call.1} parent=11 // pred_region
          %200 = vsyncadd [#allocation7], 0
          %s201 = sshll.u32 %s0, 4
          %s202 = int_to_ptr.hbm [resolvable:$true] %s201
          %s203 = sshll.u32 [#allocation6], 4
          %s204 = int_to_ptr.vmem [resolvable:$true] %s203
          %209 = dma.hbm_to_vmem [thread:$0]  %s202, 256, %s204, [#allocation7], 128, 128, 8
        $region16: #{tpu_custom_call.1} parent=11 // pred_fallthru
          _
        // Predicated region
        $region17: #{tpu_custom_call.1} parent=11 // pred_check
          %p210 = pneg %p61
        $region18: #{tpu_custom_call.1} parent=11 // pred_check_branch
          %212 = sbr.rel (%p210) target = $region20
        $region19: #{tpu_custom_call.1} parent=11 // pred_region
          %214 = vsyncadd [#allocation10], 0
          %s215 = sshll.u32 %s1, 4
          %s216 = int_to_ptr.hbm [resolvable:$true] %s215
          %s217 = sshll.u32 [#allocation9], 4
          %s218 = int_to_ptr.vmem [resolvable:$true] %s217
          %223 = dma.hbm_to_vmem [thread:$0]  %s216, 256, %s218, [#allocation10], 128, 128, 8
        $region20: #{tpu_custom_call.1} parent=11 // pred_fallthru
          _
        // Predicated region
        $region21: #{tpu_custom_call.1} parent=11 // pred_check
          %p224 = pneg %p134
        $region22: #{tpu_custom_call.1} parent=11 // pred_check_branch
          %226 = sbr.rel (%p224) target = $region24
        $region23: #{tpu_custom_call.1} parent=11 // pred_region
          _
        $region24: #{tpu_custom_call.1} parent=11 // pred_fallthru
          _
      $region12: #{tpu_custom_call.1} parent=5 // pred_fallthru
        _
      %p227 = scmp.lt.s32.totalorder %s19, 8
      // Predicated region
      $region25: #{tpu_custom_call.1} parent=5 // pred_check
        %p228 = pneg %p227
      $region26: #{tpu_custom_call.1} parent=5 // pred_check_branch
        %230 = sbr.rel (%p228) target = $region28
      $region27: #{tpu_custom_call.1} parent=5 // pred_region
        // Predicated region
        $region29: #{tpu_custom_call.1} parent=27 // pred_check
          %p231 = pneg %p81
        $region30: #{tpu_custom_call.1} parent=27 // pred_check_branch
          %233 = sbr.rel (%p231) target = $region32
        $region31: #{tpu_custom_call.1} parent=27 // pred_region
          %s234 = sand.u32 %s19, 1
          %s235 = scalar_lea.sflag [#allocation7], %s234
          %s236 = sand.u32 %s71, 1
          %s237 = smul.addr %s236, 480
          %s238 = scalar_lea.vmem [#allocation11], %s237
          %s239 = smul.u32 30, %s19
          %241 = vsyncadd %s235, 0
          %s242 = smul.addr %s239, 4
          %s243 = scalar_lea.hbm %s2, %s242
          %s244 = sshll.u32 %s243, 4
          %s245 = int_to_ptr.hbm [resolvable:$true] %s244
          %s246 = sshll.u32 %s238, 4
          %s247 = int_to_ptr.vmem [resolvable:$true] %s246
          %252 = dma.hbm_to_vmem [thread:$0]  %s245, 7680, %s247, %s235, 15360, 1920, 120
        $region32: #{tpu_custom_call.1} parent=27 // pred_fallthru
          _
        // Predicated region
        $region33: #{tpu_custom_call.1} parent=27 // pred_check
          %p253 = pneg %p107
        $region34: #{tpu_custom_call.1} parent=27 // pred_check_branch
          %255 = sbr.rel (%p253) target = $region36
        $region35: #{tpu_custom_call.1} parent=27 // pred_region
          %s256 = sand.u32 %s19, 1
          %s257 = scalar_lea.sflag [#allocation7], %s256
          %s258 = sand.u32 %s97, 1
          %s259 = smul.addr %s258, 30
          %s260 = scalar_lea.vmem [#allocation12], %s259
          %s261 = smul.u32 30, %s19
          %263 = vsyncadd %s257, 0
          %s264 = scalar_lea.hbm %s3, %s261
          %s266 = sshll.u32 %s264, 4
          %s267 = int_to_ptr.hbm [resolvable:$true] %s266
          %s268 = sshll.u32 %s260, 4
          %s269 = int_to_ptr.vmem [resolvable:$true] %s268
          %271 = dma.hbm_to_vmem [thread:$0]  %s267, 480, %s269, %s257
        $region36: #{tpu_custom_call.1} parent=27 // pred_fallthru
          _
      $region28: #{tpu_custom_call.1} parent=5 // pred_fallthru
        _
      %p272 = scmp.le.s32.totalorder 1, %s19
      %p273 = scmp.lt.s32.totalorder %s19, 9
      %p274 = pnand %p272, %p273
      %p275 = pneg %p274
      // Predicated region
      $region37: #{tpu_custom_call.1} parent=5 // pred_check
        _
      $region38: #{tpu_custom_call.1} parent=5 // pred_check_branch
        %277 = sbr.rel (%p274) target = $region40
      $region39: #{tpu_custom_call.1} parent=5 // pred_region
        %s278 = ssub.s32 %s19, 1
        // Predicated region
        $region41: #{tpu_custom_call.1} parent=39 // pred_check
          %p279 = pneg %p40
        $region42: #{tpu_custom_call.1} parent=39 // pred_check_branch
          %281 = sbr.rel (%p279) target = $region44
        $region43: #{tpu_custom_call.1} parent=39 // pred_region
          %283 = dma.done [#allocation7], 256
        $region44: #{tpu_custom_call.1} parent=39 // pred_fallthru
          _
        // Predicated region
        $region45: #{tpu_custom_call.1} parent=39 // pred_check
          %p284 = pneg %p61
        $region46: #{tpu_custom_call.1} parent=39 // pred_check_branch
          %286 = sbr.rel (%p284) target = $region48
        $region47: #{tpu_custom_call.1} parent=39 // pred_region
          %288 = dma.done [#allocation10], 256
        $region48: #{tpu_custom_call.1} parent=39 // pred_fallthru
          _
        %s289 = sand.u32 %s24, 1
        %s290 = scalar_lea.sflag [#allocation7], %s289
        %s291 = sand.u32 %s74, 1
        %s292 = smul.addr %s291, 480
        %s293 = scalar_lea.vmem [#allocation11], %s292
        // Predicated region
        $region49: #{tpu_custom_call.1} parent=39 // pred_check
          %p294 = pneg %p87
        $region50: #{tpu_custom_call.1} parent=39 // pred_check_branch
          %296 = sbr.rel (%p294) target = $region52
        $region51: #{tpu_custom_call.1} parent=39 // pred_region
          %298 = dma.done %s290, 7680
        $region52: #{tpu_custom_call.1} parent=39 // pred_fallthru
          _
        %s299 = sand.u32 %s24, 1
        %s300 = scalar_lea.sflag [#allocation7], %s299
        %s301 = sand.u32 %s100, 1
        %s302 = smul.addr %s301, 30
        %s303 = scalar_lea.vmem [#allocation12], %s302
        // Predicated region
        $region53: #{tpu_custom_call.1} parent=39 // pred_check
          %p304 = pneg %p113
        $region54: #{tpu_custom_call.1} parent=39 // pred_check_branch
          %306 = sbr.rel (%p304) target = $region56
        $region55: #{tpu_custom_call.1} parent=39 // pred_region
          %308 = dma.done %s300, 480
        $region56: #{tpu_custom_call.1} parent=39 // pred_fallthru
          _
        %p309 = pneg %p40
        %p310 = pneg %p37
        %p311 = pneg %p61
        %p312 = pneg %p58
        %s313 = sand.u32 %s24, 1
        %s314 = scalar_lea.sflag [#allocation7], %s313
        %s315 = sand.u32 %s74, 1
        %s316 = smul.addr %s315, 480
        %s317 = scalar_lea.vmem [#allocation11], %s316
        %p318 = pneg %p87
        %p319 = pneg %p84
        %s320 = sand.u32 %s24, 1
        %s321 = scalar_lea.sflag [#allocation7], %s320
        %s322 = sand.u32 %s100, 1
        %s323 = smul.addr %s322, 30
        %s324 = scalar_lea.vmem [#allocation12], %s323
        %p325 = pneg %p113
        %p326 = pneg %p110
        %p327 = pneg %p134
        %p328 = pneg %p131
        %p329 = pneg %p160
        %p330 = pneg %p157
        %s331 = sand.u32 %s147, 1
        %s332 = scalar_lea.sflag [#allocation8], %s331
        %s333 = sand.u32 %s147, 1
        %s334 = smul.addr %s333, 480
        %s335 = scalar_lea.vmem [#allocation13], %s334
        %p336 = pneg %p181
        %p337 = pneg %p178
        %s338 = smul.u32 30, %s24
        %s339 = smul.u32 30, %s24
        %s340 = smul.u32 30, %s24
        %p342 = scmp.eq.s32.totalorder %s24, 0
        // Predicated region
        $region57: #{tpu_custom_call.1} parent=39 // pred_check
          %p343 = pneg %p342
        $region58: #{tpu_custom_call.1} parent=39 // pred_check_branch
          %345 = sbr.rel (%p343) target = $region60
        $region59: #{tpu_custom_call.1} parent=39 // pred_region
          %v346 = vld [vmem:[#allocation9] sm:$0xff]
          %v347 = vld [vmem:[#allocation9 + $0x8] sm:$0xff]
          %vm348 = vcmp.ge.s32.totalorder %v346, 214748364
          %vm349 = vcmp.ge.s32.totalorder %v347, 214748364
          %v350 = vld [vmem:[#allocation6] sm:$0xff]
          %v351 = vld [vmem:[#allocation6 + $0x8] sm:$0xff]
          %v352 = vmul.f32 %v350, 1.1111112
          %v353 = vmul.f32 %v351, 1.1111112
          %v354 = vsel %vm348, %v352, 0.0
          %v355 = vsel %vm349, %v353, 0.0
          %v356 = vpack.c.bf16 %v354, %v354
          %v357 = vpack.c.bf16 %v355, %v355
          %vm358 = vcmask 257024
          %359 = vst.msk [vmem:[#allocation2] sm:$0xf] %vm358, %v356
          %360 = vst.msk [vmem:[#allocation2 + $0x4] sm:$0xf] %vm358, %v357
          %vm361 = vcmask 7168
          %362 = vst.msk [vmem:[#allocation3] sm:$0xff] %vm361, -1e+30
          %363 = vst.msk [vmem:[#allocation3 + $0x8] sm:$0xff] %vm361, -1e+30
          %364 = vst.msk [vmem:[#allocation4] sm:$0xff] %vm361, 0.0
          %365 = vst.msk [vmem:[#allocation4 + $0x8] sm:$0xff] %vm361, 0.0
          %366 = vst.msk [vmem:[#allocation5] sm:$0xff] %vm361, 0.0
          %367 = vst.msk [vmem:[#allocation5 + $0x8] sm:$0xff] %vm361, 0.0
        $region60: #{tpu_custom_call.1} parent=39 // pred_fallthru
          _
        %v368 = vld [vmem:[#allocation2] sm:$0xf]
        %v369 = vld [vmem:[#allocation2 + $0x4] sm:$0xf]
        %v370 = vld [vmem:[%s293] sm:$0xff]
        %v371 = vld [vmem:[%s293 + $0x8] sm:$0xff]
        %v372 = vld [vmem:[%s293 + $0x10] sm:$0xff]
        %v373 = vld [vmem:[%s293 + $0x18] sm:$0xff]
        %v374 = vld [vmem:[%s293 + $0x20] sm:$0xff]
        %v375 = vld [vmem:[%s293 + $0x28] sm:$0xff]
        %v376 = vld [vmem:[%s293 + $0x30] sm:$0xff]
        %v377 = vld [vmem:[%s293 + $0x38] sm:$0xff]
        %v378 = vld [vmem:[%s293 + $0x40] sm:$0xff]
        %v379 = vld [vmem:[%s293 + $0x48] sm:$0xff]
        %v380 = vld [vmem:[%s293 + $0x50] sm:$0xff]
        %v381 = vld [vmem:[%s293 + $0x58] sm:$0xff]
        %v382 = vld [vmem:[%s293 + $0x60] sm:$0xff]
        %v383 = vld [vmem:[%s293 + $0x68] sm:$0xff]
        %v384 = vld [vmem:[%s293 + $0x70] sm:$0xff]
        %v385 = vld [vmem:[%s293 + $0x78] sm:$0xff]
        %v386 = vld [vmem:[%s293 + $0x80] sm:$0xff]
        %v387 = vld [vmem:[%s293 + $0x88] sm:$0xff]
        %v388 = vld [vmem:[%s293 + $0x90] sm:$0xff]
        %v389 = vld [vmem:[%s293 + $0x98] sm:$0xff]
        %v390 = vld [vmem:[%s293 + $0xa0] sm:$0xff]
        %v391 = vld [vmem:[%s293 + $0xa8] sm:$0xff]
        %v392 = vld [vmem:[%s293 + $0xb0] sm:$0xff]
        %v393 = vld [vmem:[%s293 + $0xb8] sm:$0xff]
        %v394 = vld [vmem:[%s293 + $0xc0] sm:$0xff]
        %v395 = vld [vmem:[%s293 + $0xc8] sm:$0xff]
        %v396 = vld [vmem:[%s293 + $0xd0] sm:$0xff]
        %v397 = vld [vmem:[%s293 + $0xd8] sm:$0xff]
        %v398 = vld [vmem:[%s293 + $0xe0] sm:$0xff]
        %v399 = vld [vmem:[%s293 + $0xe8] sm:$0xff]
        %v400 = vld [vmem:[%s293 + $0xf0] sm:$0xff]
        %v401 = vld [vmem:[%s293 + $0xf8] sm:$0xff]
        %v402 = vld [vmem:[%s293 + $0x100] sm:$0xff]
        %v403 = vld [vmem:[%s293 + $0x108] sm:$0xff]
        %v404 = vld [vmem:[%s293 + $0x110] sm:$0xff]
        %v405 = vld [vmem:[%s293 + $0x118] sm:$0xff]
        %v406 = vld [vmem:[%s293 + $0x120] sm:$0xff]
        %v407 = vld [vmem:[%s293 + $0x128] sm:$0xff]
        %v408 = vld [vmem:[%s293 + $0x130] sm:$0xff]
        %v409 = vld [vmem:[%s293 + $0x138] sm:$0xff]
        %v410 = vld [vmem:[%s293 + $0x140] sm:$0xff]
        %v411 = vld [vmem:[%s293 + $0x148] sm:$0xff]
        %v412 = vld [vmem:[%s293 + $0x150] sm:$0xff]
        %v413 = vld [vmem:[%s293 + $0x158] sm:$0xff]
        %v414 = vld [vmem:[%s293 + $0x160] sm:$0xff]
        %v415 = vld [vmem:[%s293 + $0x168] sm:$0xff]
        %v416 = vld [vmem:[%s293 + $0x170] sm:$0xff]
        %v417 = vld [vmem:[%s293 + $0x178] sm:$0xff]
        %v418 = vld [vmem:[%s293 + $0x180] sm:$0xff]
        %v419 = vld [vmem:[%s293 + $0x188] sm:$0xff]
        %v420 = vld [vmem:[%s293 + $0x190] sm:$0xff]
        %v421 = vld [vmem:[%s293 + $0x198] sm:$0xff]
        %v422 = vld [vmem:[%s293 + $0x1a0] sm:$0xff]
        %v423 = vld [vmem:[%s293 + $0x1a8] sm:$0xff]
        %v424 = vld [vmem:[%s293 + $0x1b0] sm:$0xff]
        %v425 = vld [vmem:[%s293 + $0x1b8] sm:$0xff]
        %v426 = vld [vmem:[%s293 + $0x1c0] sm:$0xff]
        %v427 = vld [vmem:[%s293 + $0x1c8] sm:$0xff]
        %v428 = vld [vmem:[%s293 + $0x1d0] sm:$0xff]
        %v429 = vld [vmem:[%s293 + $0x1d8] sm:$0xff]
        %v430 = vld [vmem:[%s303] sm:$0xff]
        %v431 = vld [vmem:[%s303 + $0x8] sm:$0xff]
        %v432 = vld [vmem:[%s303 + $0x10] sm:$0xff]
        %v433 = vld [vmem:[%s303 + $0x18] sm:$0x3f]
        %v438 = vperm.slane %v430, 0
        %v439 = vperm.slane %v430, 1
        %v440 = vperm.slane %v430, 2
        %v441 = vperm.slane %v430, 3
        %v442 = vperm.slane %v430, 4
        %v443 = vperm.slane %v430, 5
        %v444 = vperm.slane %v430, 6
        %v445 = vperm.slane %v430, 7
        %v446 = vperm.slane %v431, 0
        %v447 = vperm.slane %v431, 1
        %v448 = vperm.slane %v431, 2
        %v449 = vperm.slane %v431, 3
        %v450 = vperm.slane %v431, 4
        %v451 = vperm.slane %v431, 5
        %v452 = vperm.slane %v431, 6
        %v453 = vperm.slane %v431, 7
        %v454 = vperm.slane %v432, 0
        %v455 = vperm.slane %v432, 1
        %v456 = vperm.slane %v432, 2
        %v457 = vperm.slane %v432, 3
        %v458 = vperm.slane %v432, 4
        %v459 = vperm.slane %v432, 5
        %v460 = vperm.slane %v432, 6
        %v461 = vperm.slane %v432, 7
        %v462 = vperm.slane %v433, 0
        %v463 = vperm.slane %v433, 1
        %v464 = vperm.slane %v433, 2
        %v465 = vperm.slane %v433, 3
        %v466 = vperm.slane %v433, 4
        %v467 = vperm.slane %v433, 5
        %v500 = vunpack.c.l.b16 %v368
        %v501 = vunpack.c.l.b16 %v369
        %v502 = vpack.c.b16 %v501, %v500
        %v563 = vunpack.c.l.b16 %v370
        %v564 = vunpack.c.h.b16 %v370
        %v565 = vunpack.c.l.b16 %v371
        %v566 = vunpack.c.h.b16 %v371
        %v567 = vunpack.c.l.b16 %v372
        %v568 = vunpack.c.h.b16 %v372
        %v569 = vunpack.c.l.b16 %v373
        %v570 = vunpack.c.h.b16 %v373
        %v571 = vunpack.c.l.b16 %v374
        %v572 = vunpack.c.h.b16 %v374
        %v573 = vunpack.c.l.b16 %v375
        %v574 = vunpack.c.h.b16 %v375
        %v575 = vunpack.c.l.b16 %v376
        %v576 = vunpack.c.h.b16 %v376
        %v577 = vunpack.c.l.b16 %v377
        %v578 = vunpack.c.h.b16 %v377
        %v579 = vunpack.c.l.b16 %v378
        %v580 = vunpack.c.h.b16 %v378
        %v581 = vunpack.c.l.b16 %v379
        %v582 = vunpack.c.h.b16 %v379
        %v583 = vunpack.c.l.b16 %v380
        %v584 = vunpack.c.h.b16 %v380
        %v585 = vunpack.c.l.b16 %v381
        %v586 = vunpack.c.h.b16 %v381
        %v587 = vunpack.c.l.b16 %v382
        %v588 = vunpack.c.h.b16 %v382
        %v589 = vunpack.c.l.b16 %v383
        %v590 = vunpack.c.h.b16 %v383
        %v591 = vunpack.c.l.b16 %v384
        %v592 = vunpack.c.h.b16 %v384
        %v593 = vunpack.c.l.b16 %v385
        %v594 = vunpack.c.h.b16 %v385
        %v595 = vunpack.c.l.b16 %v386
        %v596 = vunpack.c.h.b16 %v386
        %v597 = vunpack.c.l.b16 %v387
        %v598 = vunpack.c.h.b16 %v387
        %v599 = vunpack.c.l.b16 %v388
        %v600 = vunpack.c.h.b16 %v388
        %v601 = vunpack.c.l.b16 %v389
        %v602 = vunpack.c.h.b16 %v389
        %v603 = vunpack.c.l.b16 %v390
        %v604 = vunpack.c.h.b16 %v390
        %v605 = vunpack.c.l.b16 %v391
        %v606 = vunpack.c.h.b16 %v391
        %v607 = vunpack.c.l.b16 %v392
        %v608 = vunpack.c.h.b16 %v392
        %v609 = vunpack.c.l.b16 %v393
        %v610 = vunpack.c.h.b16 %v393
        %v611 = vunpack.c.l.b16 %v394
        %v612 = vunpack.c.h.b16 %v394
        %v613 = vunpack.c.l.b16 %v395
        %v614 = vunpack.c.h.b16 %v395
        %v615 = vunpack.c.l.b16 %v396
        %v616 = vunpack.c.h.b16 %v396
        %v617 = vunpack.c.l.b16 %v397
        %v618 = vunpack.c.h.b16 %v397
        %v619 = vunpack.c.l.b16 %v398
        %v620 = vunpack.c.h.b16 %v398
        %v621 = vunpack.c.l.b16 %v399
        %v622 = vunpack.c.h.b16 %v399
        %v623 = vunpack.c.l.b16 %v400
        %v624 = vunpack.c.h.b16 %v400
        %v625 = vunpack.c.l.b16 %v401
        %v626 = vunpack.c.h.b16 %v401
        %v627 = vunpack.c.l.b16 %v402
        %v628 = vunpack.c.h.b16 %v402
        %v629 = vunpack.c.l.b16 %v403
        %v630 = vunpack.c.h.b16 %v403
        %v631 = vunpack.c.l.b16 %v404
        %v632 = vunpack.c.h.b16 %v404
        %v633 = vunpack.c.l.b16 %v405
        %v634 = vunpack.c.h.b16 %v405
        %v635 = vunpack.c.l.b16 %v406
        %v636 = vunpack.c.h.b16 %v406
        %v637 = vunpack.c.l.b16 %v407
        %v638 = vunpack.c.h.b16 %v407
        %v639 = vunpack.c.l.b16 %v408
        %v640 = vunpack.c.h.b16 %v408
        %v641 = vunpack.c.l.b16 %v409
        %v642 = vunpack.c.h.b16 %v409
        %v643 = vunpack.c.l.b16 %v410
        %v644 = vunpack.c.h.b16 %v410
        %v645 = vunpack.c.l.b16 %v411
        %v646 = vunpack.c.h.b16 %v411
        %v647 = vunpack.c.l.b16 %v412
        %v648 = vunpack.c.h.b16 %v412
        %v649 = vunpack.c.l.b16 %v413
        %v650 = vunpack.c.h.b16 %v413
        %v651 = vunpack.c.l.b16 %v414
        %v652 = vunpack.c.h.b16 %v414
        %v653 = vunpack.c.l.b16 %v415
        %v654 = vunpack.c.h.b16 %v415
        %v655 = vunpack.c.l.b16 %v416
        %v656 = vunpack.c.h.b16 %v416
        %v657 = vunpack.c.l.b16 %v417
        %v658 = vunpack.c.h.b16 %v417
        %v659 = vunpack.c.l.b16 %v418
        %v660 = vunpack.c.h.b16 %v418
        %v661 = vunpack.c.l.b16 %v419
        %v662 = vunpack.c.h.b16 %v419
        %v663 = vunpack.c.l.b16 %v420
        %v664 = vunpack.c.h.b16 %v420
        %v665 = vunpack.c.l.b16 %v421
        %v666 = vunpack.c.h.b16 %v421
        %v667 = vunpack.c.l.b16 %v422
        %v668 = vunpack.c.h.b16 %v422
        %v669 = vunpack.c.l.b16 %v423
        %v670 = vunpack.c.h.b16 %v423
        %v671 = vunpack.c.l.b16 %v424
        %v672 = vunpack.c.h.b16 %v424
        %v673 = vunpack.c.l.b16 %v425
        %v674 = vunpack.c.h.b16 %v425
        %v675 = vunpack.c.l.b16 %v426
        %v676 = vunpack.c.h.b16 %v426
        %v677 = vunpack.c.l.b16 %v427
        %v678 = vunpack.c.h.b16 %v427
        %v679 = vunpack.c.l.b16 %v428
        %v680 = vunpack.c.h.b16 %v428
        %v681 = vunpack.c.l.b16 %v429
        %v682 = vunpack.c.h.b16 %v429
        %v683 = vpack.c.b16 %v593, %v563
        %v684 = vpack.c.b16 %v594, %v564
        %v685 = vpack.c.b16 %v595, %v565
        %v686 = vpack.c.b16 %v596, %v566
        %v687 = vpack.c.b16 %v597, %v567
        %v688 = vpack.c.b16 %v598, %v568
        %v689 = vpack.c.b16 %v599, %v569
        %v690 = vpack.c.b16 %v600, %v570
        %v691 = vpack.c.b16 %v601, %v571
        %v692 = vpack.c.b16 %v602, %v572
        %v693 = vpack.c.b16 %v603, %v573
        %v694 = vpack.c.b16 %v604, %v574
        %v695 = vpack.c.b16 %v605, %v575
        %v696 = vpack.c.b16 %v606, %v576
        %v697 = vpack.c.b16 %v607, %v577
        %v698 = vpack.c.b16 %v608, %v578
        %v699 = vpack.c.b16 %v609, %v579
        %v700 = vpack.c.b16 %v610, %v580
        %v701 = vpack.c.b16 %v611, %v581
        %v702 = vpack.c.b16 %v612, %v582
        %v703 = vpack.c.b16 %v613, %v583
        %v704 = vpack.c.b16 %v614, %v584
        %v705 = vpack.c.b16 %v615, %v585
        %v706 = vpack.c.b16 %v616, %v586
        %v707 = vpack.c.b16 %v617, %v587
        %v708 = vpack.c.b16 %v618, %v588
        %v709 = vpack.c.b16 %v619, %v589
        %v710 = vpack.c.b16 %v620, %v590
        %v711 = vpack.c.b16 %v621, %v591
        %v712 = vpack.c.b16 %v622, %v592
        %v713 = vpack.c.b16 %v653, %v623
        %v714 = vpack.c.b16 %v654, %v624
        %v715 = vpack.c.b16 %v655, %v625
        %v716 = vpack.c.b16 %v656, %v626
        %v717 = vpack.c.b16 %v657, %v627
        %v718 = vpack.c.b16 %v658, %v628
        %v719 = vpack.c.b16 %v659, %v629
        %v720 = vpack.c.b16 %v660, %v630
        %v721 = vpack.c.b16 %v661, %v631
        %v722 = vpack.c.b16 %v662, %v632
        %v723 = vpack.c.b16 %v663, %v633
        %v724 = vpack.c.b16 %v664, %v634
        %v725 = vpack.c.b16 %v665, %v635
        %v726 = vpack.c.b16 %v666, %v636
        %v727 = vpack.c.b16 %v667, %v637
        %v728 = vpack.c.b16 %v668, %v638
        %v729 = vpack.c.b16 %v669, %v639
        %v730 = vpack.c.b16 %v670, %v640
        %v731 = vpack.c.b16 %v671, %v641
        %v732 = vpack.c.b16 %v672, %v642
        %v733 = vpack.c.b16 %v673, %v643
        %v734 = vpack.c.b16 %v674, %v644
        %v735 = vpack.c.b16 %v675, %v645
        %v736 = vpack.c.b16 %v676, %v646
        %v737 = vpack.c.b16 %v677, %v647
        %v738 = vpack.c.b16 %v678, %v648
        %v739 = vpack.c.b16 %v679, %v649
        %v740 = vpack.c.b16 %v680, %v650
        %v741 = vpack.c.b16 %v681, %v651
        %v742 = vpack.c.b16 %v682, %v652
        %vm803 = vcmask 261120
        %v805 = vsel %vm803, %v502, 0
        %807 = vmatpush.bf16.msra.mxu0 0
        %808 = vmatpush.bf16.msra.mxu0 0
        %809 = vmatpush.bf16.msra.mxu0 0
        %810 = vmatpush.bf16.msra.mxu0 0
        %811 = vmatpush.bf16.msra.mxu0 0
        %812 = vmatpush.bf16.msra.mxu0 0
        %813 = vmatpush.bf16.msra.mxu0 %v713
        %814 = vmatpush.bf16.msra.mxu0 %v683
        %815 = vmatmul.bf16.gmra.mxu0 %v805
        %v816 = vpop.f32.mrf.mxu0
        %v817 = vadd.f32 %v438, %v816
        %v818 = vpop.f32.mrf.mxu0
        %v819 = vadd.f32 %v438, %v818
        %820 = vdwg.mxu0
        %821 = vmatpush.bf16.msra.mxu0 0
        %822 = vmatpush.bf16.msra.mxu0 0
        %823 = vmatpush.bf16.msra.mxu0 0
        %824 = vmatpush.bf16.msra.mxu0 0
        %825 = vmatpush.bf16.msra.mxu0 0
        %826 = vmatpush.bf16.msra.mxu0 0
        %827 = vmatpush.bf16.msra.mxu0 %v714
        %828 = vmatpush.bf16.msra.mxu0 %v684
        %829 = vmatmul.bf16.gmra.mxu0 %v805
        %v830 = vpop.f32.mrf.mxu0
        %v831 = vadd.f32 %v439, %v830
        %v832 = vpop.f32.mrf.mxu0
        %v833 = vadd.f32 %v439, %v832
        %834 = vdwg.mxu0
        %835 = vmatpush.bf16.msra.mxu0 0
        %836 = vmatpush.bf16.msra.mxu0 0
        %837 = vmatpush.bf16.msra.mxu0 0
        %838 = vmatpush.bf16.msra.mxu0 0
        %839 = vmatpush.bf16.msra.mxu0 0
        %840 = vmatpush.bf16.msra.mxu0 0
        %841 = vmatpush.bf16.msra.mxu0 %v715
        %842 = vmatpush.bf16.msra.mxu0 %v685
        %843 = vmatmul.bf16.gmra.mxu0 %v805
        %v844 = vpop.f32.mrf.mxu0
        %v845 = vadd.f32 %v440, %v844
        %v846 = vpop.f32.mrf.mxu0
        %v847 = vadd.f32 %v440, %v846
        %848 = vdwg.mxu0
        %849 = vmatpush.bf16.msra.mxu0 0
        %850 = vmatpush.bf16.msra.mxu0 0
        %851 = vmatpush.bf16.msra.mxu0 0
        %852 = vmatpush.bf16.msra.mxu0 0
        %853 = vmatpush.bf16.msra.mxu0 0
        %854 = vmatpush.bf16.msra.mxu0 0
        %855 = vmatpush.bf16.msra.mxu0 %v716
        %856 = vmatpush.bf16.msra.mxu0 %v686
        %857 = vmatmul.bf16.gmra.mxu0 %v805
        %v858 = vpop.f32.mrf.mxu0
        %v859 = vadd.f32 %v441, %v858
        %v860 = vpop.f32.mrf.mxu0
        %v861 = vadd.f32 %v441, %v860
        %862 = vdwg.mxu0
        %863 = vmatpush.bf16.msra.mxu0 0
        %864 = vmatpush.bf16.msra.mxu0 0
        %865 = vmatpush.bf16.msra.mxu0 0
        %866 = vmatpush.bf16.msra.mxu0 0
        %867 = vmatpush.bf16.msra.mxu0 0
        %868 = vmatpush.bf16.msra.mxu0 0
        %869 = vmatpush.bf16.msra.mxu0 %v717
        %870 = vmatpush.bf16.msra.mxu0 %v687
        %871 = vmatmul.bf16.gmra.mxu0 %v805
        %v872 = vpop.f32.mrf.mxu0
        %v873 = vadd.f32 %v442, %v872
        %v874 = vpop.f32.mrf.mxu0
        %v875 = vadd.f32 %v442, %v874
        %876 = vdwg.mxu0
        %877 = vmatpush.bf16.msra.mxu0 0
        %878 = vmatpush.bf16.msra.mxu0 0
        %879 = vmatpush.bf16.msra.mxu0 0
        %880 = vmatpush.bf16.msra.mxu0 0
        %881 = vmatpush.bf16.msra.mxu0 0
        %882 = vmatpush.bf16.msra.mxu0 0
        %883 = vmatpush.bf16.msra.mxu0 %v718
        %884 = vmatpush.bf16.msra.mxu0 %v688
        %885 = vmatmul.bf16.gmra.mxu0 %v805
        %v886 = vpop.f32.mrf.mxu0
        %v887 = vadd.f32 %v443, %v886
        %v888 = vpop.f32.mrf.mxu0
        %v889 = vadd.f32 %v443, %v888
        %890 = vdwg.mxu0
        %891 = vmatpush.bf16.msra.mxu0 0
        %892 = vmatpush.bf16.msra.mxu0 0
        %893 = vmatpush.bf16.msra.mxu0 0
        %894 = vmatpush.bf16.msra.mxu0 0
        %895 = vmatpush.bf16.msra.mxu0 0
        %896 = vmatpush.bf16.msra.mxu0 0
        %897 = vmatpush.bf16.msra.mxu0 %v719
        %898 = vmatpush.bf16.msra.mxu0 %v689
        %899 = vmatmul.bf16.gmra.mxu0 %v805
        %v900 = vpop.f32.mrf.mxu0
        %v901 = vadd.f32 %v444, %v900
        %v902 = vpop.f32.mrf.mxu0
        %v903 = vadd.f32 %v444, %v902
        %904 = vdwg.mxu0
        %905 = vmatpush.bf16.msra.mxu0 0
        %906 = vmatpush.bf16.msra.mxu0 0
        %907 = vmatpush.bf16.msra.mxu0 0
        %908 = vmatpush.bf16.msra.mxu0 0
        %909 = vmatpush.bf16.msra.mxu0 0
        %910 = vmatpush.bf16.msra.mxu0 0
        %911 = vmatpush.bf16.msra.mxu0 %v720
        %912 = vmatpush.bf16.msra.mxu0 %v690
        %913 = vmatmul.bf16.gmra.mxu0 %v805
        %v914 = vpop.f32.mrf.mxu0
        %v915 = vadd.f32 %v445, %v914
        %v916 = vpop.f32.mrf.mxu0
        %v917 = vadd.f32 %v445, %v916
        %918 = vdwg.mxu0
        %919 = vmatpush.bf16.msra.mxu0 0
        %920 = vmatpush.bf16.msra.mxu0 0
        %921 = vmatpush.bf16.msra.mxu0 0
        %922 = vmatpush.bf16.msra.mxu0 0
        %923 = vmatpush.bf16.msra.mxu0 0
        %924 = vmatpush.bf16.msra.mxu0 0
        %925 = vmatpush.bf16.msra.mxu0 %v721
        %926 = vmatpush.bf16.msra.mxu0 %v691
        %927 = vmatmul.bf16.gmra.mxu0 %v805
        %v928 = vpop.f32.mrf.mxu0
        %v929 = vadd.f32 %v446, %v928
        %v930 = vpop.f32.mrf.mxu0
        %v931 = vadd.f32 %v446, %v930
        %932 = vdwg.mxu0
        %933 = vmatpush.bf16.msra.mxu0 0
        %934 = vmatpush.bf16.msra.mxu0 0
        %935 = vmatpush.bf16.msra.mxu0 0
        %936 = vmatpush.bf16.msra.mxu0 0
        %937 = vmatpush.bf16.msra.mxu0 0
        %938 = vmatpush.bf16.msra.mxu0 0
        %939 = vmatpush.bf16.msra.mxu0 %v722
        %940 = vmatpush.bf16.msra.mxu0 %v692
        %941 = vmatmul.bf16.gmra.mxu0 %v805
        %v942 = vpop.f32.mrf.mxu0
        %v943 = vadd.f32 %v447, %v942
        %v944 = vpop.f32.mrf.mxu0
        %v945 = vadd.f32 %v447, %v944
        %946 = vdwg.mxu0
        %947 = vmatpush.bf16.msra.mxu0 0
        %948 = vmatpush.bf16.msra.mxu0 0
        %949 = vmatpush.bf16.msra.mxu0 0
        %950 = vmatpush.bf16.msra.mxu0 0
        %951 = vmatpush.bf16.msra.mxu0 0
        %952 = vmatpush.bf16.msra.mxu0 0
        %953 = vmatpush.bf16.msra.mxu0 %v723
        %954 = vmatpush.bf16.msra.mxu0 %v693
        %955 = vmatmul.bf16.gmra.mxu0 %v805
        %v956 = vpop.f32.mrf.mxu0
        %v957 = vadd.f32 %v448, %v956
        %v958 = vpop.f32.mrf.mxu0
        %v959 = vadd.f32 %v448, %v958
        %960 = vdwg.mxu0
        %961 = vmatpush.bf16.msra.mxu0 0
        %962 = vmatpush.bf16.msra.mxu0 0
        %963 = vmatpush.bf16.msra.mxu0 0
        %964 = vmatpush.bf16.msra.mxu0 0
        %965 = vmatpush.bf16.msra.mxu0 0
        %966 = vmatpush.bf16.msra.mxu0 0
        %967 = vmatpush.bf16.msra.mxu0 %v724
        %968 = vmatpush.bf16.msra.mxu0 %v694
        %969 = vmatmul.bf16.gmra.mxu0 %v805
        %v970 = vpop.f32.mrf.mxu0
        %v971 = vadd.f32 %v449, %v970
        %v972 = vpop.f32.mrf.mxu0
        %v973 = vadd.f32 %v449, %v972
        %974 = vdwg.mxu0
        %975 = vmatpush.bf16.msra.mxu0 0
        %976 = vmatpush.bf16.msra.mxu0 0
        %977 = vmatpush.bf16.msra.mxu0 0
        %978 = vmatpush.bf16.msra.mxu0 0
        %979 = vmatpush.bf16.msra.mxu0 0
        %980 = vmatpush.bf16.msra.mxu0 0
        %981 = vmatpush.bf16.msra.mxu0 %v725
        %982 = vmatpush.bf16.msra.mxu0 %v695
        %983 = vmatmul.bf16.gmra.mxu0 %v805
        %v984 = vpop.f32.mrf.mxu0
        %v985 = vadd.f32 %v450, %v984
        %v986 = vpop.f32.mrf.mxu0
        %v987 = vadd.f32 %v450, %v986
        %988 = vdwg.mxu0
        %989 = vmatpush.bf16.msra.mxu0 0
        %990 = vmatpush.bf16.msra.mxu0 0
        %991 = vmatpush.bf16.msra.mxu0 0
        %992 = vmatpush.bf16.msra.mxu0 0
        %993 = vmatpush.bf16.msra.mxu0 0
        %994 = vmatpush.bf16.msra.mxu0 0
        %995 = vmatpush.bf16.msra.mxu0 %v726
        %996 = vmatpush.bf16.msra.mxu0 %v696
        %997 = vmatmul.bf16.gmra.mxu0 %v805
        %v998 = vpop.f32.mrf.mxu0
        %v999 = vadd.f32 %v451, %v998
        %v1000 = vpop.f32.mrf.mxu0
        %v1001 = vadd.f32 %v451, %v1000
        %1002 = vdwg.mxu0
        %1003 = vmatpush.bf16.msra.mxu0 0
        %1004 = vmatpush.bf16.msra.mxu0 0
        %1005 = vmatpush.bf16.msra.mxu0 0
        %1006 = vmatpush.bf16.msra.mxu0 0
        %1007 = vmatpush.bf16.msra.mxu0 0
        %1008 = vmatpush.bf16.msra.mxu0 0
        %1009 = vmatpush.bf16.msra.mxu0 %v727
        %1010 = vmatpush.bf16.msra.mxu0 %v697
        %1011 = vmatmul.bf16.gmra.mxu0 %v805
        %v1012 = vpop.f32.mrf.mxu0
        %v1013 = vadd.f32 %v452, %v1012
        %v1014 = vpop.f32.mrf.mxu0
        %v1015 = vadd.f32 %v452, %v1014
        %1016 = vdwg.mxu0
        %1017 = vmatpush.bf16.msra.mxu0 0
        %1018 = vmatpush.bf16.msra.mxu0 0
        %1019 = vmatpush.bf16.msra.mxu0 0
        %1020 = vmatpush.bf16.msra.mxu0 0
        %1021 = vmatpush.bf16.msra.mxu0 0
        %1022 = vmatpush.bf16.msra.mxu0 0
        %1023 = vmatpush.bf16.msra.mxu0 %v728
        %1024 = vmatpush.bf16.msra.mxu0 %v698
        %1025 = vmatmul.bf16.gmra.mxu0 %v805
        %v1026 = vpop.f32.mrf.mxu0
        %v1027 = vadd.f32 %v453, %v1026
        %v1028 = vpop.f32.mrf.mxu0
        %v1029 = vadd.f32 %v453, %v1028
        %1030 = vdwg.mxu0
        %1031 = vmatpush.bf16.msra.mxu0 0
        %1032 = vmatpush.bf16.msra.mxu0 0
        %1033 = vmatpush.bf16.msra.mxu0 0
        %1034 = vmatpush.bf16.msra.mxu0 0
        %1035 = vmatpush.bf16.msra.mxu0 0
        %1036 = vmatpush.bf16.msra.mxu0 0
        %1037 = vmatpush.bf16.msra.mxu0 %v729
        %1038 = vmatpush.bf16.msra.mxu0 %v699
        %1039 = vmatmul.bf16.gmra.mxu0 %v805
        %v1040 = vpop.f32.mrf.mxu0
        %v1041 = vadd.f32 %v454, %v1040
        %v1042 = vpop.f32.mrf.mxu0
        %v1043 = vadd.f32 %v454, %v1042
        %1044 = vdwg.mxu0
        %1045 = vmatpush.bf16.msra.mxu0 0
        %1046 = vmatpush.bf16.msra.mxu0 0
        %1047 = vmatpush.bf16.msra.mxu0 0
        %1048 = vmatpush.bf16.msra.mxu0 0
        %1049 = vmatpush.bf16.msra.mxu0 0
        %1050 = vmatpush.bf16.msra.mxu0 0
        %1051 = vmatpush.bf16.msra.mxu0 %v730
        %1052 = vmatpush.bf16.msra.mxu0 %v700
        %1053 = vmatmul.bf16.gmra.mxu0 %v805
        %v1054 = vpop.f32.mrf.mxu0
        %v1055 = vadd.f32 %v455, %v1054
        %v1056 = vpop.f32.mrf.mxu0
        %v1057 = vadd.f32 %v455, %v1056
        %1058 = vdwg.mxu0
        %1059 = vmatpush.bf16.msra.mxu0 0
        %1060 = vmatpush.bf16.msra.mxu0 0
        %1061 = vmatpush.bf16.msra.mxu0 0
        %1062 = vmatpush.bf16.msra.mxu0 0
        %1063 = vmatpush.bf16.msra.mxu0 0
        %1064 = vmatpush.bf16.msra.mxu0 0
        %1065 = vmatpush.bf16.msra.mxu0 %v731
        %1066 = vmatpush.bf16.msra.mxu0 %v701
        %1067 = vmatmul.bf16.gmra.mxu0 %v805
        %v1068 = vpop.f32.mrf.mxu0
        %v1069 = vadd.f32 %v456, %v1068
        %v1070 = vpop.f32.mrf.mxu0
        %v1071 = vadd.f32 %v456, %v1070
        %1072 = vdwg.mxu0
        %1073 = vmatpush.bf16.msra.mxu0 0
        %1074 = vmatpush.bf16.msra.mxu0 0
        %1075 = vmatpush.bf16.msra.mxu0 0
        %1076 = vmatpush.bf16.msra.mxu0 0
        %1077 = vmatpush.bf16.msra.mxu0 0
        %1078 = vmatpush.bf16.msra.mxu0 0
        %1079 = vmatpush.bf16.msra.mxu0 %v732
        %1080 = vmatpush.bf16.msra.mxu0 %v702
        %1081 = vmatmul.bf16.gmra.mxu0 %v805
        %v1082 = vpop.f32.mrf.mxu0
        %v1083 = vadd.f32 %v457, %v1082
        %v1084 = vpop.f32.mrf.mxu0
        %v1085 = vadd.f32 %v457, %v1084
        %1086 = vdwg.mxu0
        %1087 = vmatpush.bf16.msra.mxu0 0
        %1088 = vmatpush.bf16.msra.mxu0 0
        %1089 = vmatpush.bf16.msra.mxu0 0
        %1090 = vmatpush.bf16.msra.mxu0 0
        %1091 = vmatpush.bf16.msra.mxu0 0
        %1092 = vmatpush.bf16.msra.mxu0 0
        %1093 = vmatpush.bf16.msra.mxu0 %v733
        %1094 = vmatpush.bf16.msra.mxu0 %v703
        %1095 = vmatmul.bf16.gmra.mxu0 %v805
        %v1096 = vpop.f32.mrf.mxu0
        %v1097 = vadd.f32 %v458, %v1096
        %v1098 = vpop.f32.mrf.mxu0
        %v1099 = vadd.f32 %v458, %v1098
        %1100 = vdwg.mxu0
        %1101 = vmatpush.bf16.msra.mxu0 0
        %1102 = vmatpush.bf16.msra.mxu0 0
        %1103 = vmatpush.bf16.msra.mxu0 0
        %1104 = vmatpush.bf16.msra.mxu0 0
        %1105 = vmatpush.bf16.msra.mxu0 0
        %1106 = vmatpush.bf16.msra.mxu0 0
        %1107 = vmatpush.bf16.msra.mxu0 %v734
        %1108 = vmatpush.bf16.msra.mxu0 %v704
        %1109 = vmatmul.bf16.gmra.mxu0 %v805
        %v1110 = vpop.f32.mrf.mxu0
        %v1111 = vadd.f32 %v459, %v1110
        %v1112 = vpop.f32.mrf.mxu0
        %v1113 = vadd.f32 %v459, %v1112
        %1114 = vdwg.mxu0
        %1115 = vmatpush.bf16.msra.mxu0 0
        %1116 = vmatpush.bf16.msra.mxu0 0
        %1117 = vmatpush.bf16.msra.mxu0 0
        %1118 = vmatpush.bf16.msra.mxu0 0
        %1119 = vmatpush.bf16.msra.mxu0 0
        %1120 = vmatpush.bf16.msra.mxu0 0
        %1121 = vmatpush.bf16.msra.mxu0 %v735
        %1122 = vmatpush.bf16.msra.mxu0 %v705
        %1123 = vmatmul.bf16.gmra.mxu0 %v805
        %v1124 = vpop.f32.mrf.mxu0
        %v1125 = vadd.f32 %v460, %v1124
        %v1126 = vpop.f32.mrf.mxu0
        %v1127 = vadd.f32 %v460, %v1126
        %1128 = vdwg.mxu0
        %1129 = vmatpush.bf16.msra.mxu0 0
        %1130 = vmatpush.bf16.msra.mxu0 0
        %1131 = vmatpush.bf16.msra.mxu0 0
        %1132 = vmatpush.bf16.msra.mxu0 0
        %1133 = vmatpush.bf16.msra.mxu0 0
        %1134 = vmatpush.bf16.msra.mxu0 0
        %1135 = vmatpush.bf16.msra.mxu0 %v736
        %1136 = vmatpush.bf16.msra.mxu0 %v706
        %1137 = vmatmul.bf16.gmra.mxu0 %v805
        %v1138 = vpop.f32.mrf.mxu0
        %v1139 = vadd.f32 %v461, %v1138
        %v1140 = vpop.f32.mrf.mxu0
        %v1141 = vadd.f32 %v461, %v1140
        %1142 = vdwg.mxu0
        %1143 = vmatpush.bf16.msra.mxu0 0
        %1144 = vmatpush.bf16.msra.mxu0 0
        %1145 = vmatpush.bf16.msra.mxu0 0
        %1146 = vmatpush.bf16.msra.mxu0 0
        %1147 = vmatpush.bf16.msra.mxu0 0
        %1148 = vmatpush.bf16.msra.mxu0 0
        %1149 = vmatpush.bf16.msra.mxu0 %v737
        %1150 = vmatpush.bf16.msra.mxu0 %v707
        %1151 = vmatmul.bf16.gmra.mxu0 %v805
        %v1152 = vpop.f32.mrf.mxu0
        %v1153 = vadd.f32 %v462, %v1152
        %v1154 = vpop.f32.mrf.mxu0
        %v1155 = vadd.f32 %v462, %v1154
        %1156 = vdwg.mxu0
        %1157 = vmatpush.bf16.msra.mxu0 0
        %1158 = vmatpush.bf16.msra.mxu0 0
        %1159 = vmatpush.bf16.msra.mxu0 0
        %1160 = vmatpush.bf16.msra.mxu0 0
        %1161 = vmatpush.bf16.msra.mxu0 0
        %1162 = vmatpush.bf16.msra.mxu0 0
        %1163 = vmatpush.bf16.msra.mxu0 %v738
        %1164 = vmatpush.bf16.msra.mxu0 %v708
        %1165 = vmatmul.bf16.gmra.mxu0 %v805
        %v1166 = vpop.f32.mrf.mxu0
        %v1167 = vadd.f32 %v463, %v1166
        %v1168 = vpop.f32.mrf.mxu0
        %v1169 = vadd.f32 %v463, %v1168
        %1170 = vdwg.mxu0
        %1171 = vmatpush.bf16.msra.mxu0 0
        %1172 = vmatpush.bf16.msra.mxu0 0
        %1173 = vmatpush.bf16.msra.mxu0 0
        %1174 = vmatpush.bf16.msra.mxu0 0
        %1175 = vmatpush.bf16.msra.mxu0 0
        %1176 = vmatpush.bf16.msra.mxu0 0
        %1177 = vmatpush.bf16.msra.mxu0 %v739
        %1178 = vmatpush.bf16.msra.mxu0 %v709
        %1179 = vmatmul.bf16.gmra.mxu0 %v805
        %v1180 = vpop.f32.mrf.mxu0
        %v1181 = vadd.f32 %v464, %v1180
        %v1182 = vpop.f32.mrf.mxu0
        %v1183 = vadd.f32 %v464, %v1182
        %1184 = vdwg.mxu0
        %1185 = vmatpush.bf16.msra.mxu0 0
        %1186 = vmatpush.bf16.msra.mxu0 0
        %1187 = vmatpush.bf16.msra.mxu0 0
        %1188 = vmatpush.bf16.msra.mxu0 0
        %1189 = vmatpush.bf16.msra.mxu0 0
        %1190 = vmatpush.bf16.msra.mxu0 0
        %1191 = vmatpush.bf16.msra.mxu0 %v740
        %1192 = vmatpush.bf16.msra.mxu0 %v710
        %1193 = vmatmul.bf16.gmra.mxu0 %v805
        %v1194 = vpop.f32.mrf.mxu0
        %v1195 = vadd.f32 %v465, %v1194
        %v1196 = vpop.f32.mrf.mxu0
        %v1197 = vadd.f32 %v465, %v1196
        %1198 = vdwg.mxu0
        %1199 = vmatpush.bf16.msra.mxu0 0
        %1200 = vmatpush.bf16.msra.mxu0 0
        %1201 = vmatpush.bf16.msra.mxu0 0
        %1202 = vmatpush.bf16.msra.mxu0 0
        %1203 = vmatpush.bf16.msra.mxu0 0
        %1204 = vmatpush.bf16.msra.mxu0 0
        %1205 = vmatpush.bf16.msra.mxu0 %v741
        %1206 = vmatpush.bf16.msra.mxu0 %v711
        %1207 = vmatmul.bf16.gmra.mxu0 %v805
        %v1208 = vpop.f32.mrf.mxu0
        %v1209 = vadd.f32 %v466, %v1208
        %v1210 = vpop.f32.mrf.mxu0
        %v1211 = vadd.f32 %v466, %v1210
        %1212 = vdwg.mxu0
        %1213 = vmatpush.bf16.msra.mxu0 0
        %1214 = vmatpush.bf16.msra.mxu0 0
        %1215 = vmatpush.bf16.msra.mxu0 0
        %1216 = vmatpush.bf16.msra.mxu0 0
        %1217 = vmatpush.bf16.msra.mxu0 0
        %1218 = vmatpush.bf16.msra.mxu0 0
        %1219 = vmatpush.bf16.msra.mxu0 %v742
        %1220 = vmatpush.bf16.msra.mxu0 %v712
        %1221 = vmatmul.bf16.gmra.mxu0 %v805
        %v1222 = vpop.f32.mrf.mxu0
        %v1223 = vadd.f32 %v467, %v1222
        %v1224 = vpop.f32.mrf.mxu0
        %v1225 = vadd.f32 %v467, %v1224
        %1226 = vdwg.mxu0
        %1227 = vst [vmem:[%s335] sm:$0xff] %v817
        %1228 = vst [vmem:[%s335 + $0x8] sm:$0xff] %v831
        %1229 = vst [vmem:[%s335 + $0x10] sm:$0xff] %v845
        %1230 = vst [vmem:[%s335 + $0x18] sm:$0xff] %v859
        %1231 = vst [vmem:[%s335 + $0x20] sm:$0xff] %v873
        %1232 = vst [vmem:[%s335 + $0x28] sm:$0xff] %v887
        %1233 = vst [vmem:[%s335 + $0x30] sm:$0xff] %v901
        %1234 = vst [vmem:[%s335 + $0x38] sm:$0xff] %v915
        %1235 = vst [vmem:[%s335 + $0x40] sm:$0xff] %v929
        %1236 = vst [vmem:[%s335 + $0x48] sm:$0xff] %v943
        %1237 = vst [vmem:[%s335 + $0x50] sm:$0xff] %v957
        %1238 = vst [vmem:[%s335 + $0x58] sm:$0xff] %v971
        %1239 = vst [vmem:[%s335 + $0x60] sm:$0xff] %v985
        %1240 = vst [vmem:[%s335 + $0x68] sm:$0xff] %v999
        %1241 = vst [vmem:[%s335 + $0x70] sm:$0xff] %v1013
        %1242 = vst [vmem:[%s335 + $0x78] sm:$0xff] %v1027
        %1243 = vst [vmem:[%s335 + $0x80] sm:$0xff] %v1041
        %1244 = vst [vmem:[%s335 + $0x88] sm:$0xff] %v1055
        %1245 = vst [vmem:[%s335 + $0x90] sm:$0xff] %v1069
        %1246 = vst [vmem:[%s335 + $0x98] sm:$0xff] %v1083
        %1247 = vst [vmem:[%s335 + $0xa0] sm:$0xff] %v1097
        %1248 = vst [vmem:[%s335 + $0xa8] sm:$0xff] %v1111
        %1249 = vst [vmem:[%s335 + $0xb0] sm:$0xff] %v1125
        %1250 = vst [vmem:[%s335 + $0xb8] sm:$0xff] %v1139
        %1251 = vst [vmem:[%s335 + $0xc0] sm:$0xff] %v1153
        %1252 = vst [vmem:[%s335 + $0xc8] sm:$0xff] %v1167
        %1253 = vst [vmem:[%s335 + $0xd0] sm:$0xff] %v1181
        %1254 = vst [vmem:[%s335 + $0xd8] sm:$0xff] %v1195
        %1255 = vst [vmem:[%s335 + $0xe0] sm:$0xff] %v1209
        %1256 = vst [vmem:[%s335 + $0xe8] sm:$0xff] %v1223
        %1257 = vst [vmem:[%s335 + $0xf0] sm:$0xff] %v819
        %1258 = vst [vmem:[%s335 + $0xf8] sm:$0xff] %v833
        %1259 = vst [vmem:[%s335 + $0x100] sm:$0xff] %v847
        %1260 = vst [vmem:[%s335 + $0x108] sm:$0xff] %v861
        %1261 = vst [vmem:[%s335 + $0x110] sm:$0xff] %v875
        %1262 = vst [vmem:[%s335 + $0x118] sm:$0xff] %v889
        %1263 = vst [vmem:[%s335 + $0x120] sm:$0xff] %v903
        %1264 = vst [vmem:[%s335 + $0x128] sm:$0xff] %v917
        %1265 = vst [vmem:[%s335 + $0x130] sm:$0xff] %v931
        %1266 = vst [vmem:[%s335 + $0x138] sm:$0xff] %v945
        %1267 = vst [vmem:[%s335 + $0x140] sm:$0xff] %v959
        %1268 = vst [vmem:[%s335 + $0x148] sm:$0xff] %v973
        %1269 = vst [vmem:[%s335 + $0x150] sm:$0xff] %v987
        %1270 = vst [vmem:[%s335 + $0x158] sm:$0xff] %v1001
        %1271 = vst [vmem:[%s335 + $0x160] sm:$0xff] %v1015
        %1272 = vst [vmem:[%s335 + $0x168] sm:$0xff] %v1029
        %1273 = vst [vmem:[%s335 + $0x170] sm:$0xff] %v1043
        %1274 = vst [vmem:[%s335 + $0x178] sm:$0xff] %v1057
        %1275 = vst [vmem:[%s335 + $0x180] sm:$0xff] %v1071
        %1276 = vst [vmem:[%s335 + $0x188] sm:$0xff] %v1085
        %1277 = vst [vmem:[%s335 + $0x190] sm:$0xff] %v1099
        %1278 = vst [vmem:[%s335 + $0x198] sm:$0xff] %v1113
        %1279 = vst [vmem:[%s335 + $0x1a0] sm:$0xff] %v1127
        %1280 = vst [vmem:[%s335 + $0x1a8] sm:$0xff] %v1141
        %1281 = vst [vmem:[%s335 + $0x1b0] sm:$0xff] %v1155
        %1282 = vst [vmem:[%s335 + $0x1b8] sm:$0xff] %v1169
        %1283 = vst [vmem:[%s335 + $0x1c0] sm:$0xff] %v1183
        %1284 = vst [vmem:[%s335 + $0x1c8] sm:$0xff] %v1197
        %1285 = vst [vmem:[%s335 + $0x1d0] sm:$0xff] %v1211
        %1286 = vst [vmem:[%s335 + $0x1d8] sm:$0xff] %v1225
        %s1287 = smul.u32 %s24, 3840
        %v1288 = vlaneseq
        %v1289 = vand.u32 %v1288, 127
        %v1290 = vadd.s32 %v1289, 128
        %v1291 = vadd.s32 %v1289, 256
        %v1292 = vadd.s32 %v1289, 384
        %v1293 = vadd.s32 %v1289, 512
        %v1294 = vadd.s32 %v1289, 640
        %v1295 = vadd.s32 %v1289, 768
        %v1296 = vadd.s32 %v1289, 896
        %v1297 = vadd.s32 %v1289, 1024
        %v1298 = vadd.s32 %v1289, 1152
        %v1299 = vadd.s32 %v1289, 1280
        %v1300 = vadd.s32 %v1289, 1408
        %v1301 = vadd.s32 %v1289, 1536
        %v1302 = vadd.s32 %v1289, 1664
        %v1303 = vadd.s32 %v1289, 1792
        %v1304 = vadd.s32 %v1289, 1920
        %v1305 = vadd.s32 %v1289, 2048
        %v1306 = vadd.s32 %v1289, 2176
        %v1307 = vadd.s32 %v1289, 2304
        %v1308 = vadd.s32 %v1289, 2432
        %v1309 = vadd.s32 %v1289, 2560
        %v1310 = vadd.s32 %v1289, 2688
        %v1311 = vadd.s32 %v1289, 2816
        %v1312 = vadd.s32 %v1289, 2944
        %v1313 = vadd.s32 %v1289, 3072
        %v1314 = vadd.s32 %v1289, 3200
        %v1315 = vadd.s32 %v1289, 3328
        %v1316 = vadd.s32 %v1289, 3456
        %v1317 = vadd.s32 %v1289, 3584
        %v1318 = vadd.s32 %v1289, 3712
        %v1319 = vstv %s1287
        %v1320 = vadd.s32 %v1319, %v1289
        %v1321 = vadd.s32 %v1319, %v1290
        %v1322 = vadd.s32 %v1319, %v1291
        %v1323 = vadd.s32 %v1319, %v1292
        %v1324 = vadd.s32 %v1319, %v1293
        %v1325 = vadd.s32 %v1319, %v1294
        %v1326 = vadd.s32 %v1319, %v1295
        %v1327 = vadd.s32 %v1319, %v1296
        %v1328 = vadd.s32 %v1319, %v1297
        %v1329 = vadd.s32 %v1319, %v1298
        %v1330 = vadd.s32 %v1319, %v1299
        %v1331 = vadd.s32 %v1319, %v1300
        %v1332 = vadd.s32 %v1319, %v1301
        %v1333 = vadd.s32 %v1319, %v1302
        %v1334 = vadd.s32 %v1319, %v1303
        %v1335 = vadd.s32 %v1319, %v1304
        %v1336 = vadd.s32 %v1319, %v1305
        %v1337 = vadd.s32 %v1319, %v1306
        %v1338 = vadd.s32 %v1319, %v1307
        %v1339 = vadd.s32 %v1319, %v1308
        %v1340 = vadd.s32 %v1319, %v1309
        %v1341 = vadd.s32 %v1319, %v1310
        %v1342 = vadd.s32 %v1319, %v1311
        %v1343 = vadd.s32 %v1319, %v1312
        %v1344 = vadd.s32 %v1319, %v1313
        %v1345 = vadd.s32 %v1319, %v1314
        %v1346 = vadd.s32 %v1319, %v1315
        %v1347 = vadd.s32 %v1319, %v1316
        %v1348 = vadd.s32 %v1319, %v1317
        %v1349 = vadd.s32 %v1319, %v1318
        %vm1350 = vcmp.lt.s32.totalorder %v1320, 30522
        %vm1351 = vcmp.lt.s32.totalorder %v1321, 30522
        %vm1352 = vcmp.lt.s32.totalorder %v1322, 30522
        %vm1353 = vcmp.lt.s32.totalorder %v1323, 30522
        %vm1354 = vcmp.lt.s32.totalorder %v1324, 30522
        %vm1355 = vcmp.lt.s32.totalorder %v1325, 30522
        %vm1356 = vcmp.lt.s32.totalorder %v1326, 30522
        %vm1357 = vcmp.lt.s32.totalorder %v1327, 30522
        %vm1358 = vcmp.lt.s32.totalorder %v1328, 30522
        %vm1359 = vcmp.lt.s32.totalorder %v1329, 30522
        %vm1360 = vcmp.lt.s32.totalorder %v1330, 30522
        %vm1361 = vcmp.lt.s32.totalorder %v1331, 30522
        %vm1362 = vcmp.lt.s32.totalorder %v1332, 30522
        %vm1363 = vcmp.lt.s32.totalorder %v1333, 30522
        %vm1364 = vcmp.lt.s32.totalorder %v1334, 30522
        %vm1365 = vcmp.lt.s32.totalorder %v1335, 30522
        %vm1366 = vcmp.lt.s32.totalorder %v1336, 30522
        %vm1367 = vcmp.lt.s32.totalorder %v1337, 30522
        %vm1368 = vcmp.lt.s32.totalorder %v1338, 30522
        %vm1369 = vcmp.lt.s32.totalorder %v1339, 30522
        %vm1370 = vcmp.lt.s32.totalorder %v1340, 30522
        %vm1371 = vcmp.lt.s32.totalorder %v1341, 30522
        %vm1372 = vcmp.lt.s32.totalorder %v1342, 30522
        %vm1373 = vcmp.lt.s32.totalorder %v1343, 30522
        %vm1374 = vcmp.lt.s32.totalorder %v1344, 30522
        %vm1375 = vcmp.lt.s32.totalorder %v1345, 30522
        %vm1376 = vcmp.lt.s32.totalorder %v1346, 30522
        %vm1377 = vcmp.lt.s32.totalorder %v1347, 30522
        %vm1378 = vcmp.lt.s32.totalorder %v1348, 30522
        %vm1379 = vcmp.lt.s32.totalorder %v1349, 30522
        %v1380 = vsel %vm1350, %v817, -1e+30
        %v1381 = vsel %vm1351, %v831, -1e+30
        %v1382 = vsel %vm1352, %v845, -1e+30
        %v1383 = vsel %vm1353, %v859, -1e+30
        %v1384 = vsel %vm1354, %v873, -1e+30
        %v1385 = vsel %vm1355, %v887, -1e+30
        %v1386 = vsel %vm1356, %v901, -1e+30
        %v1387 = vsel %vm1357, %v915, -1e+30
        %v1388 = vsel %vm1358, %v929, -1e+30
        %v1389 = vsel %vm1359, %v943, -1e+30
        %v1390 = vsel %vm1360, %v957, -1e+30
        %v1391 = vsel %vm1361, %v971, -1e+30
        %v1392 = vsel %vm1362, %v985, -1e+30
        %v1393 = vsel %vm1363, %v999, -1e+30
        %v1394 = vsel %vm1364, %v1013, -1e+30
        %v1395 = vsel %vm1365, %v1027, -1e+30
        %v1396 = vsel %vm1366, %v1041, -1e+30
        %v1397 = vsel %vm1367, %v1055, -1e+30
        %v1398 = vsel %vm1368, %v1069, -1e+30
        %v1399 = vsel %vm1369, %v1083, -1e+30
        %v1400 = vsel %vm1370, %v1097, -1e+30
        %v1401 = vsel %vm1371, %v1111, -1e+30
        %v1402 = vsel %vm1372, %v1125, -1e+30
        %v1403 = vsel %vm1373, %v1139, -1e+30
        %v1404 = vsel %vm1374, %v1153, -1e+30
        %v1405 = vsel %vm1375, %v1167, -1e+30
        %v1406 = vsel %vm1376, %v1181, -1e+30
        %v1407 = vsel %vm1377, %v1195, -1e+30
        %v1408 = vsel %vm1378, %v1209, -1e+30
        %v1409 = vsel %vm1379, %v1223, -1e+30
        %v1410 = vsel %vm1350, %v819, -1e+30
        %v1411 = vsel %vm1351, %v833, -1e+30
        %v1412 = vsel %vm1352, %v847, -1e+30
        %v1413 = vsel %vm1353, %v861, -1e+30
        %v1414 = vsel %vm1354, %v875, -1e+30
        %v1415 = vsel %vm1355, %v889, -1e+30
        %v1416 = vsel %vm1356, %v903, -1e+30
        %v1417 = vsel %vm1357, %v917, -1e+30
        %v1418 = vsel %vm1358, %v931, -1e+30
        %v1419 = vsel %vm1359, %v945, -1e+30
        %v1420 = vsel %vm1360, %v959, -1e+30
        %v1421 = vsel %vm1361, %v973, -1e+30
        %v1422 = vsel %vm1362, %v987, -1e+30
        %v1423 = vsel %vm1363, %v1001, -1e+30
        %v1424 = vsel %vm1364, %v1015, -1e+30
        %v1425 = vsel %vm1365, %v1029, -1e+30
        %v1426 = vsel %vm1366, %v1043, -1e+30
        %v1427 = vsel %vm1367, %v1057, -1e+30
        %v1428 = vsel %vm1368, %v1071, -1e+30
        %v1429 = vsel %vm1369, %v1085, -1e+30
        %v1430 = vsel %vm1370, %v1099, -1e+30
        %v1431 = vsel %vm1371, %v1113, -1e+30
        %v1432 = vsel %vm1372, %v1127, -1e+30
        %v1433 = vsel %vm1373, %v1141, -1e+30
        %v1434 = vsel %vm1374, %v1155, -1e+30
        %v1435 = vsel %vm1375, %v1169, -1e+30
        %v1436 = vsel %vm1376, %v1183, -1e+30
        %v1437 = vsel %vm1377, %v1197, -1e+30
        %v1438 = vsel %vm1378, %v1211, -1e+30
        %v1439 = vsel %vm1379, %v1225, -1e+30
        %v1440 = vld [vmem:[#allocation3] sm:$0xff]
        %v1441 = vld [vmem:[#allocation3 + $0x8] sm:$0xff]
        %v1442 = vmax.f32 %v1380, %v1382
        %v1443 = vmax.f32 %v1381, %v1383
        %v1444 = vmax.f32 %v1442, %v1384
        %v1445 = vmax.f32 %v1443, %v1385
        %v1446 = vmax.f32 %v1444, %v1386
        %v1447 = vmax.f32 %v1445, %v1387
        %v1448 = vmax.f32 %v1446, %v1388
        %v1449 = vmax.f32 %v1447, %v1389
        %v1450 = vmax.f32 %v1448, %v1390
        %v1451 = vmax.f32 %v1449, %v1391
        %v1452 = vmax.f32 %v1450, %v1392
        %v1453 = vmax.f32 %v1451, %v1393
        %v1454 = vmax.f32 %v1452, %v1394
        %v1455 = vmax.f32 %v1453, %v1395
        %v1456 = vmax.f32 %v1454, %v1396
        %v1457 = vmax.f32 %v1455, %v1397
        %v1458 = vmax.f32 %v1456, %v1398
        %v1459 = vmax.f32 %v1457, %v1399
        %v1460 = vmax.f32 %v1458, %v1400
        %v1461 = vmax.f32 %v1459, %v1401
        %v1462 = vmax.f32 %v1460, %v1402
        %v1463 = vmax.f32 %v1461, %v1403
        %v1464 = vmax.f32 %v1462, %v1404
        %v1465 = vmax.f32 %v1463, %v1405
        %v1466 = vmax.f32 %v1464, %v1406
        %v1467 = vmax.f32 %v1465, %v1407
        %v1468 = vmax.f32 %v1466, %v1408
        %v1469 = vmax.f32 %v1467, %v1409
        %v1470 = vmax.f32 %v1468, %v1469
        %1471 = vmax.xlane.f32.xlu0 %v1470
        %v1472 = vpop.xlane.xlu0 %1471
        %v1473 = vmax.f32 %v1410, %v1412
        %v1474 = vmax.f32 %v1411, %v1413
        %v1475 = vmax.f32 %v1473, %v1414
        %v1476 = vmax.f32 %v1474, %v1415
        %v1477 = vmax.f32 %v1475, %v1416
        %v1478 = vmax.f32 %v1476, %v1417
        %v1479 = vmax.f32 %v1477, %v1418
        %v1480 = vmax.f32 %v1478, %v1419
        %v1481 = vmax.f32 %v1479, %v1420
        %v1482 = vmax.f32 %v1480, %v1421
        %v1483 = vmax.f32 %v1481, %v1422
        %v1484 = vmax.f32 %v1482, %v1423
        %v1485 = vmax.f32 %v1483, %v1424
        %v1486 = vmax.f32 %v1484, %v1425
        %v1487 = vmax.f32 %v1485, %v1426
        %v1488 = vmax.f32 %v1486, %v1427
        %v1489 = vmax.f32 %v1487, %v1428
        %v1490 = vmax.f32 %v1488, %v1429
        %v1491 = vmax.f32 %v1489, %v1430
        %v1492 = vmax.f32 %v1490, %v1431
        %v1493 = vmax.f32 %v1491, %v1432
        %v1494 = vmax.f32 %v1492, %v1433
        %v1495 = vmax.f32 %v1493, %v1434
        %v1496 = vmax.f32 %v1494, %v1435
        %v1497 = vmax.f32 %v1495, %v1436
        %v1498 = vmax.f32 %v1496, %v1437
        %v1499 = vmax.f32 %v1497, %v1438
        %v1500 = vmax.f32 %v1498, %v1439
        %v1501 = vmax.f32 %v1499, %v1500
        %1502 = vmax.xlane.f32.xlu0 %v1501
        %v1503 = vpop.xlane.xlu0 %1502
        %v1504 = vmax.f32 %v1440, %v1472
        %v1505 = vmax.f32 %v1441, %v1503
        %v1506 = vsub.f32 %v1440, %v1504
        %v1507 = vsub.f32 %v1441, %v1505
        %v1508 = vmul.f32 %v1506, 1.442695
        %v1509 = vpow.pop %v1508
        %v1510 = vmul.f32 %v1507, 1.442695
        %v1511 = vpow.pop %v1510
        %v1512 = vld [vmem:[#allocation4] sm:$0xff]
        %v1513 = vld [vmem:[#allocation4 + $0x8] sm:$0xff]
        %v1514 = vmul.f32 %v1509, %v1512
        %v1515 = vmul.f32 %v1511, %v1513
        %1517 = vset.pattern.permute.xlu0 0
        %1518 = vperm.xlu0 %1517, %v1504
        %v1519 = vpop.permute.xlu0 %1518
        %1522 = vset.pattern.permute.xlu0 0
        %1523 = vperm.xlu0 %1522, %v1505
        %v1524 = vpop.permute.xlu0 %1523
        %v1526 = vsub.f32 %v1380, %v1519
        %v1527 = vsub.f32 %v1381, %v1519
        %v1528 = vsub.f32 %v1382, %v1519
        %v1529 = vsub.f32 %v1383, %v1519
        %v1530 = vsub.f32 %v1384, %v1519
        %v1531 = vsub.f32 %v1385, %v1519
        %v1532 = vsub.f32 %v1386, %v1519
        %v1533 = vsub.f32 %v1387, %v1519
        %v1534 = vsub.f32 %v1388, %v1519
        %v1535 = vsub.f32 %v1389, %v1519
        %v1536 = vsub.f32 %v1390, %v1519
        %v1537 = vsub.f32 %v1391, %v1519
        %v1538 = vsub.f32 %v1392, %v1519
        %v1539 = vsub.f32 %v1393, %v1519
        %v1540 = vsub.f32 %v1394, %v1519
        %v1541 = vsub.f32 %v1395, %v1519
        %v1542 = vsub.f32 %v1396, %v1519
        %v1543 = vsub.f32 %v1397, %v1519
        %v1544 = vsub.f32 %v1398, %v1519
        %v1545 = vsub.f32 %v1399, %v1519
        %v1546 = vsub.f32 %v1400, %v1519
        %v1547 = vsub.f32 %v1401, %v1519
        %v1548 = vsub.f32 %v1402, %v1519
        %v1549 = vsub.f32 %v1403, %v1519
        %v1550 = vsub.f32 %v1404, %v1519
        %v1551 = vsub.f32 %v1405, %v1519
        %v1552 = vsub.f32 %v1406, %v1519
        %v1553 = vsub.f32 %v1407, %v1519
        %v1554 = vsub.f32 %v1408, %v1519
        %v1555 = vsub.f32 %v1409, %v1519
        %v1556 = vsub.f32 %v1410, %v1524
        %v1557 = vsub.f32 %v1411, %v1524
        %v1558 = vsub.f32 %v1412, %v1524
        %v1559 = vsub.f32 %v1413, %v1524
        %v1560 = vsub.f32 %v1414, %v1524
        %v1561 = vsub.f32 %v1415, %v1524
        %v1562 = vsub.f32 %v1416, %v1524
        %v1563 = vsub.f32 %v1417, %v1524
        %v1564 = vsub.f32 %v1418, %v1524
        %v1565 = vsub.f32 %v1419, %v1524
        %v1566 = vsub.f32 %v1420, %v1524
        %v1567 = vsub.f32 %v1421, %v1524
        %v1568 = vsub.f32 %v1422, %v1524
        %v1569 = vsub.f32 %v1423, %v1524
        %v1570 = vsub.f32 %v1424, %v1524
        %v1571 = vsub.f32 %v1425, %v1524
        %v1572 = vsub.f32 %v1426, %v1524
        %v1573 = vsub.f32 %v1427, %v1524
        %v1574 = vsub.f32 %v1428, %v1524
        %v1575 = vsub.f32 %v1429, %v1524
        %v1576 = vsub.f32 %v1430, %v1524
        %v1577 = vsub.f32 %v1431, %v1524
        %v1578 = vsub.f32 %v1432, %v1524
        %v1579 = vsub.f32 %v1433, %v1524
        %v1580 = vsub.f32 %v1434, %v1524
        %v1581 = vsub.f32 %v1435, %v1524
        %v1582 = vsub.f32 %v1436, %v1524
        %v1583 = vsub.f32 %v1437, %v1524
        %v1584 = vsub.f32 %v1438, %v1524
        %v1585 = vsub.f32 %v1439, %v1524
        %v1586 = vmul.f32 %v1526, 1.442695
        %v1587 = vpow.pop %v1586
        %v1588 = vmul.f32 %v1527, 1.442695
        %v1589 = vpow.pop %v1588
        %v1590 = vmul.f32 %v1528, 1.442695
        %v1591 = vpow.pop %v1590
        %v1592 = vmul.f32 %v1529, 1.442695
        %v1593 = vpow.pop %v1592
        %v1594 = vmul.f32 %v1530, 1.442695
        %v1595 = vpow.pop %v1594
        %v1596 = vmul.f32 %v1531, 1.442695
        %v1597 = vpow.pop %v1596
        %v1598 = vmul.f32 %v1532, 1.442695
        %v1599 = vpow.pop %v1598
        %v1600 = vmul.f32 %v1533, 1.442695
        %v1601 = vpow.pop %v1600
        %v1602 = vmul.f32 %v1534, 1.442695
        %v1603 = vpow.pop %v1602
        %v1604 = vmul.f32 %v1535, 1.442695
        %v1605 = vpow.pop %v1604
        %v1606 = vmul.f32 %v1536, 1.442695
        %v1607 = vpow.pop %v1606
        %v1608 = vmul.f32 %v1537, 1.442695
        %v1609 = vpow.pop %v1608
        %v1610 = vmul.f32 %v1538, 1.442695
        %v1611 = vpow.pop %v1610
        %v1612 = vmul.f32 %v1539, 1.442695
        %v1613 = vpow.pop %v1612
        %v1614 = vmul.f32 %v1540, 1.442695
        %v1615 = vpow.pop %v1614
        %v1616 = vmul.f32 %v1541, 1.442695
        %v1617 = vpow.pop %v1616
        %v1618 = vmul.f32 %v1542, 1.442695
        %v1619 = vpow.pop %v1618
        %v1620 = vmul.f32 %v1543, 1.442695
        %v1621 = vpow.pop %v1620
        %v1622 = vmul.f32 %v1544, 1.442695
        %v1623 = vpow.pop %v1622
        %v1624 = vmul.f32 %v1545, 1.442695
        %v1625 = vpow.pop %v1624
        %v1626 = vmul.f32 %v1546, 1.442695
        %v1627 = vpow.pop %v1626
        %v1628 = vmul.f32 %v1547, 1.442695
        %v1629 = vpow.pop %v1628
        %v1630 = vmul.f32 %v1548, 1.442695
        %v1631 = vpow.pop %v1630
        %v1632 = vmul.f32 %v1549, 1.442695
        %v1633 = vpow.pop %v1632
        %v1634 = vmul.f32 %v1550, 1.442695
        %v1635 = vpow.pop %v1634
        %v1636 = vmul.f32 %v1551, 1.442695
        %v1637 = vpow.pop %v1636
        %v1638 = vmul.f32 %v1552, 1.442695
        %v1639 = vpow.pop %v1638
        %v1640 = vmul.f32 %v1553, 1.442695
        %v1641 = vpow.pop %v1640
        %v1642 = vmul.f32 %v1554, 1.442695
        %v1643 = vpow.pop %v1642
        %v1644 = vmul.f32 %v1555, 1.442695
        %v1645 = vpow.pop %v1644
        %v1646 = vmul.f32 %v1556, 1.442695
        %v1647 = vpow.pop %v1646
        %v1648 = vmul.f32 %v1557, 1.442695
        %v1649 = vpow.pop %v1648
        %v1650 = vmul.f32 %v1558, 1.442695
        %v1651 = vpow.pop %v1650
        %v1652 = vmul.f32 %v1559, 1.442695
        %v1653 = vpow.pop %v1652
        %v1654 = vmul.f32 %v1560, 1.442695
        %v1655 = vpow.pop %v1654
        %v1656 = vmul.f32 %v1561, 1.442695
        %v1657 = vpow.pop %v1656
        %v1658 = vmul.f32 %v1562, 1.442695
        %v1659 = vpow.pop %v1658
        %v1660 = vmul.f32 %v1563, 1.442695
        %v1661 = vpow.pop %v1660
        %v1662 = vmul.f32 %v1564, 1.442695
        %v1663 = vpow.pop %v1662
        %v1664 = vmul.f32 %v1565, 1.442695
        %v1665 = vpow.pop %v1664
        %v1666 = vmul.f32 %v1566, 1.442695
        %v1667 = vpow.pop %v1666
        %v1668 = vmul.f32 %v1567, 1.442695
        %v1669 = vpow.pop %v1668
        %v1670 = vmul.f32 %v1568, 1.442695
        %v1671 = vpow.pop %v1670
        %v1672 = vmul.f32 %v1569, 1.442695
        %v1673 = vpow.pop %v1672
        %v1674 = vmul.f32 %v1570, 1.442695
        %v1675 = vpow.pop %v1674
        %v1676 = vmul.f32 %v1571, 1.442695
        %v1677 = vpow.pop %v1676
        %v1678 = vmul.f32 %v1572, 1.442695
        %v1679 = vpow.pop %v1678
        %v1680 = vmul.f32 %v1573, 1.442695
        %v1681 = vpow.pop %v1680
        %v1682 = vmul.f32 %v1574, 1.442695
        %v1683 = vpow.pop %v1682
        %v1684 = vmul.f32 %v1575, 1.442695
        %v1685 = vpow.pop %v1684
        %v1686 = vmul.f32 %v1576, 1.442695
        %v1687 = vpow.pop %v1686
        %v1688 = vmul.f32 %v1577, 1.442695
        %v1689 = vpow.pop %v1688
        %v1690 = vmul.f32 %v1578, 1.442695
        %v1691 = vpow.pop %v1690
        %v1692 = vmul.f32 %v1579, 1.442695
        %v1693 = vpow.pop %v1692
        %v1694 = vmul.f32 %v1580, 1.442695
        %v1695 = vpow.pop %v1694
        %v1696 = vmul.f32 %v1581, 1.442695
        %v1697 = vpow.pop %v1696
        %v1698 = vmul.f32 %v1582, 1.442695
        %v1699 = vpow.pop %v1698
        %v1700 = vmul.f32 %v1583, 1.442695
        %v1701 = vpow.pop %v1700
        %v1702 = vmul.f32 %v1584, 1.442695
        %v1703 = vpow.pop %v1702
        %v1704 = vmul.f32 %v1585, 1.442695
        %v1705 = vpow.pop %v1704
        %v1706 = vadd.f32 %v1587, %v1589
        %v1707 = vadd.f32 %v1706, %v1591
        %v1708 = vadd.f32 %v1707, %v1593
        %v1709 = vadd.f32 %v1708, %v1595
        %v1710 = vadd.f32 %v1709, %v1597
        %v1711 = vadd.f32 %v1710, %v1599
        %v1712 = vadd.f32 %v1711, %v1601
        %v1713 = vadd.f32 %v1712, %v1603
        %v1714 = vadd.f32 %v1713, %v1605
        %v1715 = vadd.f32 %v1714, %v1607
        %v1716 = vadd.f32 %v1715, %v1609
        %v1717 = vadd.f32 %v1716, %v1611
        %v1718 = vadd.f32 %v1717, %v1613
        %v1719 = vadd.f32 %v1718, %v1615
        %v1720 = vadd.f32 %v1719, %v1617
        %v1721 = vadd.f32 %v1720, %v1619
        %v1722 = vadd.f32 %v1721, %v1621
        %v1723 = vadd.f32 %v1722, %v1623
        %v1724 = vadd.f32 %v1723, %v1625
        %v1725 = vadd.f32 %v1724, %v1627
        %v1726 = vadd.f32 %v1725, %v1629
        %v1727 = vadd.f32 %v1726, %v1631
        %v1728 = vadd.f32 %v1727, %v1633
        %v1729 = vadd.f32 %v1728, %v1635
        %v1730 = vadd.f32 %v1729, %v1637
        %v1731 = vadd.f32 %v1730, %v1639
        %v1732 = vadd.f32 %v1731, %v1641
        %v1733 = vadd.f32 %v1732, %v1643
        %v1734 = vadd.f32 %v1733, %v1645
        %1735 = vadd.xlane.f32.xlu0 %v1734
        %v1736 = vpop.xlane.xlu0 %1735
        %v1737 = vadd.f32 %v1647, %v1649
        %v1738 = vadd.f32 %v1737, %v1651
        %v1739 = vadd.f32 %v1738, %v1653
        %v1740 = vadd.f32 %v1739, %v1655
        %v1741 = vadd.f32 %v1740, %v1657
        %v1742 = vadd.f32 %v1741, %v1659
        %v1743 = vadd.f32 %v1742, %v1661
        %v1744 = vadd.f32 %v1743, %v1663
        %v1745 = vadd.f32 %v1744, %v1665
        %v1746 = vadd.f32 %v1745, %v1667
        %v1747 = vadd.f32 %v1746, %v1669
        %v1748 = vadd.f32 %v1747, %v1671
        %v1749 = vadd.f32 %v1748, %v1673
        %v1750 = vadd.f32 %v1749, %v1675
        %v1751 = vadd.f32 %v1750, %v1677
        %v1752 = vadd.f32 %v1751, %v1679
        %v1753 = vadd.f32 %v1752, %v1681
        %v1754 = vadd.f32 %v1753, %v1683
        %v1755 = vadd.f32 %v1754, %v1685
        %v1756 = vadd.f32 %v1755, %v1687
        %v1757 = vadd.f32 %v1756, %v1689
        %v1758 = vadd.f32 %v1757, %v1691
        %v1759 = vadd.f32 %v1758, %v1693
        %v1760 = vadd.f32 %v1759, %v1695
        %v1761 = vadd.f32 %v1760, %v1697
        %v1762 = vadd.f32 %v1761, %v1699
        %v1763 = vadd.f32 %v1762, %v1701
        %v1764 = vadd.f32 %v1763, %v1703
        %v1765 = vadd.f32 %v1764, %v1705
        %1766 = vadd.xlane.f32.xlu0 %v1765
        %v1767 = vpop.xlane.xlu0 %1766
        %v1768 = vadd.f32 %v1514, %v1736
        %v1769 = vadd.f32 %v1515, %v1767
        %vm1770 = vcmask 7168
        %1771 = vst.msk [vmem:[#allocation4] sm:$0xff] %vm1770, %v1768
        %1772 = vst.msk [vmem:[#allocation4 + $0x8] sm:$0xff] %vm1770, %v1769
        %1773 = vst.msk [vmem:[#allocation3] sm:$0xff] %vm1770, %v1504
        %1774 = vst.msk [vmem:[#allocation3 + $0x8] sm:$0xff] %vm1770, %v1505
        %v1775 = vld [vmem:[%s4] sm:$0xff]
        %v1776 = vld [vmem:[%s4 + $0x8] sm:$0xff]
        %v1777 = vld [vmem:[#allocation5] sm:$0xff]
        %v1778 = vld [vmem:[#allocation5 + $0x8] sm:$0xff]
        %1779 = vset.pattern.permute.xlu0 0
        %1780 = vperm.xlu0 %1779, %v1775
        %v1781 = vpop.permute.xlu0 %1780
        %1782 = vset.pattern.permute.xlu0 0
        %1783 = vperm.xlu0 %1782, %v1776
        %v1784 = vpop.permute.xlu0 %1783
        %vm1785 = vcmp.eq.s32.totalorder %v1320, %v1781
        %vm1786 = vcmp.eq.s32.totalorder %v1321, %v1781
        %vm1787 = vcmp.eq.s32.totalorder %v1322, %v1781
        %vm1788 = vcmp.eq.s32.totalorder %v1323, %v1781
        %vm1789 = vcmp.eq.s32.totalorder %v1324, %v1781
        %vm1790 = vcmp.eq.s32.totalorder %v1325, %v1781
        %vm1791 = vcmp.eq.s32.totalorder %v1326, %v1781
        %vm1792 = vcmp.eq.s32.totalorder %v1327, %v1781
        %vm1793 = vcmp.eq.s32.totalorder %v1328, %v1781
        %vm1794 = vcmp.eq.s32.totalorder %v1329, %v1781
        %vm1795 = vcmp.eq.s32.totalorder %v1330, %v1781
        %vm1796 = vcmp.eq.s32.totalorder %v1331, %v1781
        %vm1797 = vcmp.eq.s32.totalorder %v1332, %v1781
        %vm1798 = vcmp.eq.s32.totalorder %v1333, %v1781
        %vm1799 = vcmp.eq.s32.totalorder %v1334, %v1781
        %vm1800 = vcmp.eq.s32.totalorder %v1335, %v1781
        %vm1801 = vcmp.eq.s32.totalorder %v1336, %v1781
        %vm1802 = vcmp.eq.s32.totalorder %v1337, %v1781
        %vm1803 = vcmp.eq.s32.totalorder %v1338, %v1781
        %vm1804 = vcmp.eq.s32.totalorder %v1339, %v1781
        %vm1805 = vcmp.eq.s32.totalorder %v1340, %v1781
        %vm1806 = vcmp.eq.s32.totalorder %v1341, %v1781
        %vm1807 = vcmp.eq.s32.totalorder %v1342, %v1781
        %vm1808 = vcmp.eq.s32.totalorder %v1343, %v1781
        %vm1809 = vcmp.eq.s32.totalorder %v1344, %v1781
        %vm1810 = vcmp.eq.s32.totalorder %v1345, %v1781
        %vm1811 = vcmp.eq.s32.totalorder %v1346, %v1781
        %vm1812 = vcmp.eq.s32.totalorder %v1347, %v1781
        %vm1813 = vcmp.eq.s32.totalorder %v1348, %v1781
        %vm1814 = vcmp.eq.s32.totalorder %v1349, %v1781
        %vm1815 = vcmp.eq.s32.totalorder %v1320, %v1784
        %vm1816 = vcmp.eq.s32.totalorder %v1321, %v1784
        %vm1817 = vcmp.eq.s32.totalorder %v1322, %v1784
        %vm1818 = vcmp.eq.s32.totalorder %v1323, %v1784
        %vm1819 = vcmp.eq.s32.totalorder %v1324, %v1784
        %vm1820 = vcmp.eq.s32.totalorder %v1325, %v1784
        %vm1821 = vcmp.eq.s32.totalorder %v1326, %v1784
        %vm1822 = vcmp.eq.s32.totalorder %v1327, %v1784
        %vm1823 = vcmp.eq.s32.totalorder %v1328, %v1784
        %vm1824 = vcmp.eq.s32.totalorder %v1329, %v1784
        %vm1825 = vcmp.eq.s32.totalorder %v1330, %v1784
        %vm1826 = vcmp.eq.s32.totalorder %v1331, %v1784
        %vm1827 = vcmp.eq.s32.totalorder %v1332, %v1784
        %vm1828 = vcmp.eq.s32.totalorder %v1333, %v1784
        %vm1829 = vcmp.eq.s32.totalorder %v1334, %v1784
        %vm1830 = vcmp.eq.s32.totalorder %v1335, %v1784
        %vm1831 = vcmp.eq.s32.totalorder %v1336, %v1784
        %vm1832 = vcmp.eq.s32.totalorder %v1337, %v1784
        %vm1833 = vcmp.eq.s32.totalorder %v1338, %v1784
        %vm1834 = vcmp.eq.s32.totalorder %v1339, %v1784
        %vm1835 = vcmp.eq.s32.totalorder %v1340, %v1784
        %vm1836 = vcmp.eq.s32.totalorder %v1341, %v1784
        %vm1837 = vcmp.eq.s32.totalorder %v1342, %v1784
        %vm1838 = vcmp.eq.s32.totalorder %v1343, %v1784
        %vm1839 = vcmp.eq.s32.totalorder %v1344, %v1784
        %vm1840 = vcmp.eq.s32.totalorder %v1345, %v1784
        %vm1841 = vcmp.eq.s32.totalorder %v1346, %v1784
        %vm1842 = vcmp.eq.s32.totalorder %v1347, %v1784
        %vm1843 = vcmp.eq.s32.totalorder %v1348, %v1784
        %vm1844 = vcmp.eq.s32.totalorder %v1349, %v1784
        %v1845 = vsel %vm1785, %v817, 0.0
        %v1846 = vsel %vm1786, %v831, 0.0
        %v1847 = vsel %vm1787, %v845, 0.0
        %v1848 = vsel %vm1788, %v859, 0.0
        %v1849 = vsel %vm1789, %v873, 0.0
        %v1850 = vsel %vm1790, %v887, 0.0
        %v1851 = vsel %vm1791, %v901, 0.0
        %v1852 = vsel %vm1792, %v915, 0.0
        %v1853 = vsel %vm1793, %v929, 0.0
        %v1854 = vsel %vm1794, %v943, 0.0
        %v1855 = vsel %vm1795, %v957, 0.0
        %v1856 = vsel %vm1796, %v971, 0.0
        %v1857 = vsel %vm1797, %v985, 0.0
        %v1858 = vsel %vm1798, %v999, 0.0
        %v1859 = vsel %vm1799, %v1013, 0.0
        %v1860 = vsel %vm1800, %v1027, 0.0
        %v1861 = vsel %vm1801, %v1041, 0.0
        %v1862 = vsel %vm1802, %v1055, 0.0
        %v1863 = vsel %vm1803, %v1069, 0.0
        %v1864 = vsel %vm1804, %v1083, 0.0
        %v1865 = vsel %vm1805, %v1097, 0.0
        %v1866 = vsel %vm1806, %v1111, 0.0
        %v1867 = vsel %vm1807, %v1125, 0.0
        %v1868 = vsel %vm1808, %v1139, 0.0
        %v1869 = vsel %vm1809, %v1153, 0.0
        %v1870 = vsel %vm1810, %v1167, 0.0
        %v1871 = vsel %vm1811, %v1181, 0.0
        %v1872 = vsel %vm1812, %v1195, 0.0
        %v1873 = vsel %vm1813, %v1209, 0.0
        %v1874 = vsel %vm1814, %v1223, 0.0
        %v1875 = vsel %vm1815, %v819, 0.0
        %v1876 = vsel %vm1816, %v833, 0.0
        %v1877 = vsel %vm1817, %v847, 0.0
        %v1878 = vsel %vm1818, %v861, 0.0
        %v1879 = vsel %vm1819, %v875, 0.0
        %v1880 = vsel %vm1820, %v889, 0.0
        %v1881 = vsel %vm1821, %v903, 0.0
        %v1882 = vsel %vm1822, %v917, 0.0
        %v1883 = vsel %vm1823, %v931, 0.0
        %v1884 = vsel %vm1824, %v945, 0.0
        %v1885 = vsel %vm1825, %v959, 0.0
        %v1886 = vsel %vm1826, %v973, 0.0
        %v1887 = vsel %vm1827, %v987, 0.0
        %v1888 = vsel %vm1828, %v1001, 0.0
        %v1889 = vsel %vm1829, %v1015, 0.0
        %v1890 = vsel %vm1830, %v1029, 0.0
        %v1891 = vsel %vm1831, %v1043, 0.0
        %v1892 = vsel %vm1832, %v1057, 0.0
        %v1893 = vsel %vm1833, %v1071, 0.0
        %v1894 = vsel %vm1834, %v1085, 0.0
        %v1895 = vsel %vm1835, %v1099, 0.0
        %v1896 = vsel %vm1836, %v1113, 0.0
        %v1897 = vsel %vm1837, %v1127, 0.0
        %v1898 = vsel %vm1838, %v1141, 0.0
        %v1899 = vsel %vm1839, %v1155, 0.0
        %v1900 = vsel %vm1840, %v1169, 0.0
        %v1901 = vsel %vm1841, %v1183, 0.0
        %v1902 = vsel %vm1842, %v1197, 0.0
        %v1903 = vsel %vm1843, %v1211, 0.0
        %v1904 = vsel %vm1844, %v1225, 0.0
        %v1905 = vadd.f32 %v1845, %v1846
        %v1906 = vadd.f32 %v1905, %v1847
        %v1907 = vadd.f32 %v1906, %v1848
        %v1908 = vadd.f32 %v1907, %v1849
        %v1909 = vadd.f32 %v1908, %v1850
        %v1910 = vadd.f32 %v1909, %v1851
        %v1911 = vadd.f32 %v1910, %v1852
        %v1912 = vadd.f32 %v1911, %v1853
        %v1913 = vadd.f32 %v1912, %v1854
        %v1914 = vadd.f32 %v1913, %v1855
        %v1915 = vadd.f32 %v1914, %v1856
        %v1916 = vadd.f32 %v1915, %v1857
        %v1917 = vadd.f32 %v1916, %v1858
        %v1918 = vadd.f32 %v1917, %v1859
        %v1919 = vadd.f32 %v1918, %v1860
        %v1920 = vadd.f32 %v1919, %v1861
        %v1921 = vadd.f32 %v1920, %v1862
        %v1922 = vadd.f32 %v1921, %v1863
        %v1923 = vadd.f32 %v1922, %v1864
        %v1924 = vadd.f32 %v1923, %v1865
        %v1925 = vadd.f32 %v1924, %v1866
        %v1926 = vadd.f32 %v1925, %v1867
        %v1927 = vadd.f32 %v1926, %v1868
        %v1928 = vadd.f32 %v1927, %v1869
        %v1929 = vadd.f32 %v1928, %v1870
        %v1930 = vadd.f32 %v1929, %v1871
        %v1931 = vadd.f32 %v1930, %v1872
        %v1932 = vadd.f32 %v1931, %v1873
        %v1933 = vadd.f32 %v1932, %v1874
        %1934 = vadd.xlane.f32.xlu0 %v1933
        %v1935 = vpop.xlane.xlu0 %1934
        %v1936 = vadd.f32 %v1875, %v1876
        %v1937 = vadd.f32 %v1936, %v1877
        %v1938 = vadd.f32 %v1937, %v1878
        %v1939 = vadd.f32 %v1938, %v1879
        %v1940 = vadd.f32 %v1939, %v1880
        %v1941 = vadd.f32 %v1940, %v1881
        %v1942 = vadd.f32 %v1941, %v1882
        %v1943 = vadd.f32 %v1942, %v1883
        %v1944 = vadd.f32 %v1943, %v1884
        %v1945 = vadd.f32 %v1944, %v1885
        %v1946 = vadd.f32 %v1945, %v1886
        %v1947 = vadd.f32 %v1946, %v1887
        %v1948 = vadd.f32 %v1947, %v1888
        %v1949 = vadd.f32 %v1948, %v1889
        %v1950 = vadd.f32 %v1949, %v1890
        %v1951 = vadd.f32 %v1950, %v1891
        %v1952 = vadd.f32 %v1951, %v1892
        %v1953 = vadd.f32 %v1952, %v1893
        %v1954 = vadd.f32 %v1953, %v1894
        %v1955 = vadd.f32 %v1954, %v1895
        %v1956 = vadd.f32 %v1955, %v1896
        %v1957 = vadd.f32 %v1956, %v1897
        %v1958 = vadd.f32 %v1957, %v1898
        %v1959 = vadd.f32 %v1958, %v1899
        %v1960 = vadd.f32 %v1959, %v1900
        %v1961 = vadd.f32 %v1960, %v1901
        %v1962 = vadd.f32 %v1961, %v1902
        %v1963 = vadd.f32 %v1962, %v1903
        %v1964 = vadd.f32 %v1963, %v1904
        %1965 = vadd.xlane.f32.xlu0 %v1964
        %v1966 = vpop.xlane.xlu0 %1965
        %v1967 = vadd.f32 %v1777, %v1935
        %v1968 = vadd.f32 %v1778, %v1966
        %1969 = vst.msk [vmem:[#allocation5] sm:$0xff] %vm1770, %v1967
        %1970 = vst.msk [vmem:[#allocation5 + $0x8] sm:$0xff] %vm1770, %v1968
        %p1971 = scmp.eq.s32.totalorder %s24, 7
        // Predicated region
        $region61: #{tpu_custom_call.1} parent=39 // pred_check
          %p1972 = pneg %p1971
        $region62: #{tpu_custom_call.1} parent=39 // pred_check_branch
          %1974 = sbr.rel (%p1972) target = $region64
        $region63: #{tpu_custom_call.1} parent=39 // pred_region
          %v1975 = vld [vmem:[#allocation3] sm:$0xff]
          %v1976 = vld [vmem:[#allocation3 + $0x8] sm:$0xff]
          %v1977 = vld [vmem:[#allocation4] sm:$0xff]
          %v1978 = vld [vmem:[#allocation4 + $0x8] sm:$0xff]
          %v1979 = vlog2.pop %v1977
          %v1980 = vmul.f32 %v1979, 0.6931472
          %v1981 = vlog2.pop %v1978
          %v1982 = vmul.f32 %v1981, 0.6931472
          %v1983 = vadd.f32 %v1975, %v1980
          %v1984 = vadd.f32 %v1976, %v1982
          %v1985 = vld [vmem:[#allocation5] sm:$0xff]
          %v1986 = vld [vmem:[#allocation5 + $0x8] sm:$0xff]
          %v1987 = vsub.f32 %v1983, %v1985
          %v1988 = vsub.f32 %v1984, %v1986
          %v1989 = vld [vmem:[%s4] sm:$0xff]
          %v1990 = vld [vmem:[%s4 + $0x8] sm:$0xff]
          %vm1991 = vcmp.ne.s32.totalorder %v1989, 0
          %vm1992 = vcmp.ne.s32.totalorder %v1990, 0
          %v1993 = vsel %vm1991, 1, 0
          %v1994 = vsel %vm1992, 1, 0
          %v1995 = vcvt.s32.f32 %v1993
          %v1996 = vcvt.s32.f32 %v1994
          %v1997 = vmul.f32 %v1987, %v1995
          %v1998 = vmul.f32 %v1988, %v1996
          %v1999 = vsel %vm1770, %v1997, 0.0
          %v2000 = vsel %vm1770, %v1998, 0.0
          %v2001 = vadd.f32 %v1999, %v2000
          %v2002 = vrot.slane %v2001, 4
          %v2003 = vadd.f32 %v2001, %v2002
          %v2004 = vrot.slane %v2003, 2
          %v2005 = vadd.f32 %v2003, %v2004
          %v2006 = vrot.slane %v2005, 1
          %v2007 = vadd.f32 %v2005, %v2006
          %v2008 = vsel %vm1770, %v1995, 0.0
          %v2009 = vsel %vm1770, %v1996, 0.0
          %v2010 = vadd.f32 %v2008, %v2009
          %v2011 = vrot.slane %v2010, 4
          %v2012 = vadd.f32 %v2010, %v2011
          %v2013 = vrot.slane %v2012, 2
          %v2014 = vadd.f32 %v2012, %v2013
          %v2015 = vrot.slane %v2014, 1
          %v2016 = vadd.f32 %v2014, %v2015
          %v2017 = vmax.f32 %v2016, 1.0
          %v2018 = vrcp.pop %v2017
          %v2019 = vmul.f32 %v2017, %v2018
          %v2020 = vsub.f32 1.0, %v2019
          %v2021 = vmul.f32 %v2018, %v2020
          %v2022 = vadd.f32 %v2018, %v2021
          %vm2023 = vweird.f32 %v2017
          %vm2024 = vweird.f32 %v2018
          %vm2025 = vmor %vm2023, %vm2024
          %v2026 = vsel %vm2025, %v2018, %v2022
          %v2027 = vand.u32 2147483647, %v2017
          %vm2028 = vcmp.eq.f32.partialorder %v2027, 8.507059e+37
          %v2029 = vand.u32 %v2017, 2147483648
          %v2030 = vor.u32 1.1754944e-38, %v2029
          %v2031 = vsel %vm2028, %v2030, %v2026
          %v2032 = vmul.f32 %v2007, %v2031
          %vm2033 = vcmask 0
          %2034 = vst.msk [vmem:[#allocation14] sm:$0x1] %vm2033, %v2032
        $region64: #{tpu_custom_call.1} parent=39 // pred_fallthru
          _
        %s2035 = sand.u32 %s147, 1
        %s2036 = scalar_lea.sflag [#allocation8], %s2035
        %s2037 = sand.u32 %s147, 1
        %s2038 = smul.addr %s2037, 480
        %s2039 = scalar_lea.vmem [#allocation13], %s2038
        // Predicated region
        $region65: #{tpu_custom_call.1} parent=39 // pred_check
          %p2040 = pneg %p157
        $region66: #{tpu_custom_call.1} parent=39 // pred_check_branch
          %2042 = sbr.rel (%p2040) target = $region68
        $region67: #{tpu_custom_call.1} parent=39 // pred_region
          %s2043 = smul.u32 30, %s24
          %2045 = vsyncadd %s2036, 0
          %s2046 = smul.addr %s2043, 8
          %s2047 = scalar_lea.hbm %s5, %s2046
          %s2048 = sshll.u32 %s2039, 4
          %s2049 = int_to_ptr.vmem [resolvable:$true] %s2048
          %s2050 = sshll.u32 %s2047, 4
          %s2051 = int_to_ptr.hbm [resolvable:$true] %s2050
          %2056 = dma.vmem_to_hbm [thread:$0]  %s2049, 7680, %s2051, %s2036, 3840, 30720, 240
        $region68: #{tpu_custom_call.1} parent=39 // pred_fallthru
          _
        // Predicated region
        $region69: #{tpu_custom_call.1} parent=39 // pred_check
          %p2057 = pneg %p178
        $region70: #{tpu_custom_call.1} parent=39 // pred_check_branch
          %2059 = sbr.rel (%p2057) target = $region72
        $region71: #{tpu_custom_call.1} parent=39 // pred_region
          %2061 = vsyncadd [#allocation15], 0
          %s2063 = sshll.u32 [#allocation14], 4
          %s2064 = int_to_ptr.vmem [resolvable:$true] %s2063
          %s2065 = sshll.u32 %s6, 4
          %s2066 = int_to_ptr.hbm [resolvable:$true] %s2065
          %2068 = dma.vmem_to_hbm [thread:$0]  %s2064, 16, %s2066, [#allocation15]
        $region72: #{tpu_custom_call.1} parent=39 // pred_fallthru
          _
        // Predicated region
        $region73: #{tpu_custom_call.1} parent=39 // pred_check
          %p2069 = pneg %p178
        $region74: #{tpu_custom_call.1} parent=39 // pred_check_branch
          %2071 = sbr.rel (%p2069) target = $region76
        $region75: #{tpu_custom_call.1} parent=39 // pred_region
          %2073 = dma.done [#allocation15], 16
        $region76: #{tpu_custom_call.1} parent=39 // pred_fallthru
          _
      $region40: #{tpu_custom_call.1} parent=5 // pred_fallthru
        _
      %p2074 = scmp.le.s32.totalorder 2, %s19
      // Predicated region
      $region77: #{tpu_custom_call.1} parent=5 // pred_check
        %p2075 = pneg %p2074
      $region78: #{tpu_custom_call.1} parent=5 // pred_check_branch
        %2077 = sbr.rel (%p2075) target = $region80
      $region79: #{tpu_custom_call.1} parent=5 // pred_region
        %s2078 = ssub.s32 %s19, 2
        // Predicated region
        $region81: #{tpu_custom_call.1} parent=79 // pred_check
          %p2079 = pneg %p163
        $region82: #{tpu_custom_call.1} parent=79 // pred_check_branch
          %2081 = sbr.rel (%p2079) target = $region84
        $region83: #{tpu_custom_call.1} parent=79 // pred_region
          %s2082 = sand.u32 %s148, 1
          %s2083 = scalar_lea.sflag [#allocation8], %s2082
          %s2084 = sand.u32 %s148, 1
          %s2085 = smul.addr %s2084, 480
          %s2086 = scalar_lea.vmem [#allocation13], %s2085
          %2088 = dma.done %s2083, 7680
        $region84: #{tpu_custom_call.1} parent=79 // pred_fallthru
          _
      $region80: #{tpu_custom_call.1} parent=5 // pred_fallthru
        _
    $region6: #{tpu_custom_call.1} parent=1 // loop_footer
      %s23 = sadd.s32 1, %s19
    $region7: #{tpu_custom_call.1} parent=1 // loop_footer_branch
      %18 = sbr.rel target = $region3
    $region8: #{tpu_custom_call.1} parent=1 // loop_exit
      _
    %2089 = vsyncpa [#allocation7], 1
    %s2090 = scalar_lea.sflag [#allocation7], 1
    %2091 = vsyncpa %s2090, 1
    %2092 = vsyncpa [#allocation10], 1
    %2093 = vsyncpa [#allocation8], 1
    %s2094 = scalar_lea.sflag [#allocation8], 1
    %2095 = vsyncpa %s2094, 1
    %2096 = vsyncpa [#allocation15], 1

</llo_original>
